<compile_context>
chip_gen: v7x
topology: tpu7x:2x2x1
jax: 0.10.0
libtpu: 0.0.40
codegen_flags: <defaults>
</compile_context>

<pallas_src>
import functools
import math

import numpy as np
import jax
import jax.numpy as jnp
from jax.experimental import pallas as pl
from jax.experimental.pallas import tpu as pltpu


def _round_up(x, m):
    return (x + m - 1) // m * m


def _generate_anchors(H, W, stride):
    # Matches torch.meshgrid([arange(H), arange(W)]) ('ij') + stack([x, y], -1).
    ys, xs = jnp.meshgrid(jnp.arange(H), jnp.arange(W), indexing="ij")
    anchors = jnp.stack([xs, ys], axis=-1).reshape(-1, 2).astype(jnp.float32)
    return (anchors + 0.5) * float(stride)


def _pred_kernel(nc,
                 stride_tbl, imgw_tbl, hw0_tbl, lvl_tbl,    # SMEM scalar prefetch
                 x_ref, w_ref, b_ref,                       # VMEM inputs
                 out_ref):                                  # VMEM output
    """One row-tile: fused 1x1 heads (single matmul) + anchor-free box decode."""
    del lvl_tbl  # only consumed by the weight/bias index_maps
    i = pl.program_id(0)
    stride = stride_tbl[i].astype(jnp.float32)   # per-level stride
    img_w = imgw_tbl[i].astype(jnp.float32)      # per-level feature-map width
    hw0 = hw0_tbl[i].astype(jnp.float32)         # first row's h*W+w offset in its image

    tm = x_ref.shape[0]
    reg_off = 1 + nc
    box_off = reg_off + 4

    # Single fused matmul: [cls_feat | reg_feat] @ [0,w_cls,0,0 ; w_obj,0,w_reg,0]
    # -> lanes [obj | cls(NC) | reg(4) | zeros(4+pad)].
    fused = jnp.dot(x_ref[...], w_ref[0],
                    preferred_element_type=jnp.float32) + b_ref[0]   # (tm, OUT_W) f32

    # Anchors from the row index (no HBM anchor stream).  hw, gx, gy are small
    # integers held exactly in f32; the +0.5 guards floor() against division
    # rounding on the hardware reciprocal path.
    row = jax.lax.broadcasted_iota(jnp.int32, (tm, 1), 0).astype(jnp.float32)
    hw = hw0 + row
    gy = jnp.floor((hw + 0.5) / img_w)
    gx = hw - gy * img_w
    ax = (gx + 0.5) * stride
    ay = (gy + 0.5) * stride

    # Box decode on the raw reg columns.
    reg = fused[:, reg_off:box_off]               # (tm, 4): [tx, ty, tw, th]
    cx = reg[:, 0:1] * stride + ax
    cy = reg[:, 1:2] * stride + ay
    bw = jnp.exp(reg[:, 2:3]) * stride
    bh = jnp.exp(reg[:, 3:4]) * stride
    box = jnp.concatenate(
        [cx - 0.5 * bw, cy - 0.5 * bh, cx + 0.5 * bw, cy + 0.5 * bh], axis=-1)

    # Single lane-dense output slab; box lanes overwritten after the full store.
    out_ref[...] = fused
    out_ref[:, box_off:box_off + 4] = box


def _pack_level_params(level_params, c_cls, c_reg, nc, out_w, w_dtype):
    """Stack per-level conv weights into fused (L, Ccls+Creg, OUT_W) / (L,1,OUT_W)."""
    ws, bs = [], []
    for p in level_params:
        w = jnp.zeros((c_cls + c_reg, out_w), jnp.float32)
        w = w.at[c_cls:, 0:1].set(p["w_obj"])                 # obj head reads reg_feat
        w = w.at[:c_cls, 1:1 + nc].set(p["w_cls"])            # cls head reads cls_feat
        w = w.at[c_cls:, 1 + nc:1 + nc + 4].set(p["w_reg"])   # reg head reads reg_feat
        b = jnp.zeros((1, out_w), jnp.float32)
        b = b.at[:, 0:1].set(p["b_obj"].reshape(1, 1))
        b = b.at[:, 1:1 + nc].set(p["b_cls"].reshape(1, nc))
        b = b.at[:, 1 + nc:1 + nc + 4].set(p["b_reg"].reshape(1, 4))
        ws.append(w)
        bs.append(b)
    return jnp.stack(ws).astype(w_dtype), jnp.stack(bs)       # bias stays f32


def yolov5_af_det_pred(cls_feats, reg_feats, level_params, out_stride,
                       *, tm=1024, feature_dtype=jnp.bfloat16):
    """Yolov5AFDetPredLayer.forward over all pyramid levels (one pallas_call)."""
    num_levels = len(cls_feats)
    nc = level_params[0]["w_cls"].shape[1]
    B, c_cls = cls_feats[0].shape[0], cls_feats[0].shape[1]
    c_reg = reg_feats[0].shape[1]
    c_tot = c_cls + c_reg
    for cf, rf in zip(cls_feats, reg_feats):
        assert cf.shape[0] == B and rf.shape[0] == B
        assert cf.shape[1] == c_cls and rf.shape[1] == c_reg

    out_w = _round_up(nc + 9, 32)          # lanes: [obj | cls | reg | box | pad]
    reg_off, box_off = 1 + nc, 1 + nc + 4

    hws = [cf.shape[2] * cf.shape[3] for cf in cls_feats]
    tm = _round_up(max(8, min(tm, _round_up(max(hws), 256))), 8)

    # Flatten NCHW -> (rows, 2C), pad each (level, batch) chunk to a tile multiple.
    x_chunks, fmp_sizes, row_meta = [], [], []
    stride_tbl, imgw_tbl, hw0_tbl, lvl_tbl = [], [], [], []
    row_base = 0
    for lvl, (cf, rf, s) in enumerate(zip(cls_feats, reg_feats, out_stride)):
        _, _, H, W = cf.shape
        hw = H * W
        p = _round_up(hw, tm)
        # TODO(synk): keep producers in NHWC to remove this extra HBM pass.
        x = jnp.concatenate(
            [jnp.transpose(cf, (0, 2, 3, 1)).reshape(B, hw, c_cls),
             jnp.transpose(rf, (0, 2, 3, 1)).reshape(B, hw, c_reg)],
            axis=-1).astype(feature_dtype)
        if p != hw:
            x = jnp.pad(x, ((0, 0), (0, p - hw), (0, 0)))
        x_chunks.append(x.reshape(B * p, c_tot))
        fmp_sizes.append([H, W])
        row_meta.append((row_base, p, hw))
        for _b in range(B):
            for j in range(p // tm):
                stride_tbl.append(int(s))
                imgw_tbl.append(int(W))
                hw0_tbl.append(j * tm)
                lvl_tbl.append(lvl)
        row_base += B * p

    x_all = jnp.concatenate(x_chunks, axis=0)                 # (N_pad, 2C)
    n_pad = x_all.shape[0]
    num_tiles = n_pad // tm
    assert num_tiles == len(lvl_tbl)

    w_stack, b_stack = _pack_level_params(level_params, c_cls, c_reg, nc,
                                          out_w, feature_dtype)

    stride_tbl = jnp.asarray(stride_tbl, jnp.int32)
    imgw_tbl = jnp.asarray(imgw_tbl, jnp.int32)
    hw0_tbl = jnp.asarray(hw0_tbl, jnp.int32)
    lvl_tbl = jnp.asarray(lvl_tbl, jnp.int32)

    grid_spec = pltpu.PrefetchScalarGridSpec(
        num_scalar_prefetch=4,
        grid=(num_tiles,),
        in_specs=[
            pl.BlockSpec((tm, c_tot), lambda i, *_: (i, 0)),                # features
            pl.BlockSpec((1, c_tot, out_w),
                         lambda i, s, w, h, lv: (lv[i], 0, 0)),             # fused W (per level)
            pl.BlockSpec((1, 1, out_w),
                         lambda i, s, w, h, lv: (lv[i], 0, 0)),             # fused bias
        ],
        out_specs=pl.BlockSpec((tm, out_w), lambda i, *_: (i, 0)),
    )

    out = pl.pallas_call(
        functools.partial(_pred_kernel, nc),
        out_shape=jax.ShapeDtypeStruct((n_pad, out_w), jnp.float32),
        grid_spec=grid_spec,
        compiler_params=pltpu.CompilerParams(
            dimension_semantics=("parallel",)),
    )(stride_tbl, imgw_tbl, hw0_tbl, lvl_tbl, x_all, w_stack, b_stack)

    outputs = {"pred_obj": [], "pred_cls": [], "pred_reg": [], "pred_box": [],
               "fmp_sizes": fmp_sizes, "anchors": [], "strides": list(out_stride)}
    for lvl, (s, (base, p, hw)) in enumerate(zip(out_stride, row_meta)):
        slab = out[base:base + B * p].reshape(B, p, out_w)[:, :hw]
        outputs["pred_obj"].append(slab[..., 0:1])
        outputs["pred_cls"].append(slab[..., 1:1 + nc])
        outputs["pred_reg"].append(slab[..., reg_off:box_off])
        outputs["pred_box"].append(slab[..., box_off:box_off + 4])
        H, W = fmp_sizes[lvl]
        outputs["anchors"].append(_generate_anchors(H, W, s))
    return outputs


def init_level_params(key, cin, num_classes):
    """Deterministic synthetic params mirroring AFDetPredLayer.__init__/init_bias."""
    k_obj, k_cls = jax.random.split(key)
    bias_value = -math.log((1.0 - 0.01) / 0.01)     # obj/cls bias prior
    return {
        # conv weights stored as (Cin, Cout) == transpose of torch (Cout, Cin, 1, 1)
        "w_obj": 0.02 * jax.random.normal(k_obj, (cin, 1), jnp.float32),
        "b_obj": jnp.full((1, 1), bias_value, jnp.float32),
        "w_cls": 0.02 * jax.random.normal(k_cls, (cin, num_classes), jnp.float32),
        "b_cls": jnp.full((1, num_classes), bias_value, jnp.float32),
        "w_reg": jnp.zeros((cin, 4), jnp.float32),   # init_bias fills reg weight with 0
        "b_reg": jnp.ones((1, 4), jnp.float32),      # init_bias fills reg bias with 1
    }


def _ref_level(cls_feat, reg_feat, params, stride):
    """Pure-JAX f32 reference for correctness checking."""
    B, C, H, W = cls_feat.shape
    HW = H * W
    cls_flat = jnp.transpose(cls_feat, (0, 2, 3, 1)).reshape(B, HW, C)
    reg_flat = jnp.transpose(reg_feat, (0, 2, 3, 1)).reshape(B, HW, C)
    obj = reg_flat @ params["w_obj"] + params["b_obj"]
    cls = cls_flat @ params["w_cls"] + params["b_cls"]
    reg = reg_flat @ params["w_reg"] + params["b_reg"]
    anchors = _generate_anchors(H, W, stride)
    cxcy = reg[..., :2] * stride + anchors[None]
    bwbh = jnp.exp(reg[..., 2:]) * stride
    box = jnp.concatenate([cxcy - 0.5 * bwbh, cxcy + 0.5 * bwbh], axis=-1)
    return obj, cls, reg, box


if __name__ == "__main__":
    # Synthetic cfg: head_dim*width -> 32 channels, 20 classes, 2 pyramid levels.
    num_levels = 2
    out_stride = [8, 16]
    num_classes = 20
    cin = 32
    B = 2
    spatial = [16, 8]          # level 0: 16x16, level 1: 8x8

    key = jax.random.PRNGKey(0)
    k_feat, k_par = jax.random.split(key)
    feat_keys = jax.random.split(k_feat, 2 * num_levels)
    par_keys = jax.random.split(k_par, num_levels)

    cls_feats, reg_feats, level_params = [], [], []
    for lvl in range(num_levels):
        s = spatial[lvl]
        cls_feats.append(jax.random.normal(feat_keys[2 * lvl], (B, cin, s, s), jnp.float32))
        reg_feats.append(jax.random.normal(feat_keys[2 * lvl + 1], (B, cin, s, s), jnp.float32))
        level_params.append(init_level_params(par_keys[lvl], cin, num_classes))

    refs = [_ref_level(cls_feats[l], reg_feats[l], level_params[l], out_stride[l])
            for l in range(num_levels)]

    # f32 path checked tightly; default bf16 (HBM-saving) path checked with a
    # tolerance appropriate for bf16 feature/weight rounding.
    for dtype, atol, rtol in ((jnp.float32, 1e-4, 1e-5), (jnp.bfloat16, 2e-2, 2e-2)):
        outputs = yolov5_af_det_pred(cls_feats, reg_feats, level_params, out_stride,
                                     feature_dtype=dtype)
        jax.block_until_ready(outputs)
        for lvl in range(num_levels):
            r_obj, r_cls, r_reg, r_box = refs[lvl]
            assert jnp.allclose(outputs["pred_obj"][lvl], r_obj, atol=atol, rtol=rtol), dtype
            assert jnp.allclose(outputs["pred_cls"][lvl], r_cls, atol=atol, rtol=rtol), dtype
            assert jnp.allclose(outputs["pred_reg"][lvl], r_reg, atol=atol, rtol=rtol), dtype
            assert jnp.allclose(outputs["pred_box"][lvl], r_box, atol=max(atol, 1e-3),
                                rtol=rtol), dtype

    print("KERNEL_OK")
</pallas_src>

<mosaic_0001>
module attributes {stable_mosaic.version = 11 : i64} {
  func.func @_pred_kernel(%arg0: i32, %arg1: memref<4xi32, #tpu.memory_space<smem>>, %arg2: memref<4xi32, #tpu.memory_space<smem>>, %arg3: memref<4xi32, #tpu.memory_space<smem>>, %arg4: memref<4xi32, #tpu.memory_space<smem>>, %arg5: memref<256x64xf32, #tpu.memory_space<vmem>>, %arg6: memref<1x64x32xf32, #tpu.memory_space<vmem>>, %arg7: memref<1x1x32xf32, #tpu.memory_space<vmem>>, %arg8: memref<256x32xf32, #tpu.memory_space<vmem>>) attributes {dimension_semantics = [#tpu.dimension_semantics<parallel>], iteration_bounds = array<i64: 4>, scalar_prefetch = 4 : i64, scratch_operands = 0 : i64, tpu.core_type = #tpu.core_type<tc>, window_params = [{transform_indices = @transform_0, window_bounds = array<i64: 256, 64>}, {transform_indices = @transform_1, window_bounds = array<i64: 1, 64, 32>}, {transform_indices = @transform_2, window_bounds = array<i64: 1, 1, 32>}, {transform_indices = @transform_3, window_bounds = array<i64: 256, 32>}]} {
    %0 = arith.index_cast %arg0 : i32 to index
    %1 = memref.load %arg1[%0] : memref<4xi32, #tpu.memory_space<smem>>
    %2 = arith.sitofp %1 : i32 to f32
    %3 = arith.index_cast %arg0 : i32 to index
    %4 = memref.load %arg2[%3] : memref<4xi32, #tpu.memory_space<smem>>
    %5 = arith.sitofp %4 : i32 to f32
    %6 = arith.index_cast %arg0 : i32 to index
    %7 = memref.load %arg3[%6] : memref<4xi32, #tpu.memory_space<smem>>
    %8 = arith.sitofp %7 : i32 to f32
    %c0 = arith.constant 0 : index
    %c0_0 = arith.constant 0 : index
    %9 = vector.load %arg5[%c0, %c0_0] : memref<256x64xf32, #tpu.memory_space<vmem>>, vector<256x64xf32>
    %c0_1 = arith.constant 0 : index
    %c0_2 = arith.constant 0 : index
    %c0_3 = arith.constant 0 : index
    %10 = vector.load %arg6[%c0_1, %c0_2, %c0_3] : memref<1x64x32xf32, #tpu.memory_space<vmem>>, vector<1x64x32xf32>
    %11 = vector.shape_cast %10 : vector<1x64x32xf32> to vector<64x32xf32>
    %cst = arith.constant dense<0.000000e+00> : vector<256x32xf32>
    %12 = tpu.matmul %9, %11, %cst {dimension_numbers = #tpu.dot_dimension_numbers<[1], [0], [0], [1], [0, 0, 1, 1], [], []>} : vector<256x64xf32>, vector<64x32xf32>, vector<256x32xf32> -> vector<256x32xf32>
    %c0_4 = arith.constant 0 : index
    %c0_5 = arith.constant 0 : index
    %c0_6 = arith.constant 0 : index
    %13 = vector.load %arg7[%c0_4, %c0_5, %c0_6] : memref<1x1x32xf32, #tpu.memory_space<vmem>>, vector<1x1x32xf32>
    %14 = vector.shape_cast %13 : vector<1x1x32xf32> to vector<1x32xf32>
    %15 = vector.broadcast %14 : vector<1x32xf32> to vector<256x32xf32>
    %16 = arith.addf %12, %15 : vector<256x32xf32>
    %17 = tpu.iota {dimensions = array<i32: 0>} : vector<256x1xi32>
    %18 = arith.sitofp %17 : vector<256x1xi32> to vector<256x1xf32>
    %19 = vector.broadcast %8 : f32 to vector<256x1xf32>
    %20 = arith.addf %19, %18 : vector<256x1xf32>
    %cst_7 = arith.constant 5.000000e-01 : f32
    %21 = vector.broadcast %cst_7 : f32 to vector<256x1xf32>
    %22 = arith.addf %20, %21 : vector<256x1xf32>
    %23 = vector.broadcast %5 : f32 to vector<256x1xf32>
    %24 = arith.divf %22, %23 : vector<256x1xf32>
    %25 = math.floor %24 : vector<256x1xf32>
    %26 = vector.broadcast %5 : f32 to vector<256x1xf32>
    %27 = arith.mulf %25, %26 : vector<256x1xf32>
    %28 = arith.subf %20, %27 : vector<256x1xf32>
    %cst_8 = arith.constant 5.000000e-01 : f32
    %29 = vector.broadcast %cst_8 : f32 to vector<256x1xf32>
    %30 = arith.addf %28, %29 : vector<256x1xf32>
    %31 = vector.broadcast %2 : f32 to vector<256x1xf32>
    %32 = arith.mulf %30, %31 : vector<256x1xf32>
    %cst_9 = arith.constant 5.000000e-01 : f32
    %33 = vector.broadcast %cst_9 : f32 to vector<256x1xf32>
    %34 = arith.addf %25, %33 : vector<256x1xf32>
    %35 = vector.broadcast %2 : f32 to vector<256x1xf32>
    %36 = arith.mulf %34, %35 : vector<256x1xf32>
    %37 = vector.extract_strided_slice %16 {offsets = [0, 21], sizes = [256, 4], strides = [1, 1]} : vector<256x32xf32> to vector<256x4xf32>
    %38 = vector.extract_strided_slice %37 {offsets = [0, 0], sizes = [256, 1], strides = [1, 1]} : vector<256x4xf32> to vector<256x1xf32>
    %39 = vector.broadcast %2 : f32 to vector<256x1xf32>
    %40 = arith.mulf %38, %39 : vector<256x1xf32>
    %41 = arith.addf %40, %32 : vector<256x1xf32>
    %42 = vector.extract_strided_slice %37 {offsets = [0, 1], sizes = [256, 1], strides = [1, 1]} : vector<256x4xf32> to vector<256x1xf32>
    %43 = vector.broadcast %2 : f32 to vector<256x1xf32>
    %44 = arith.mulf %42, %43 : vector<256x1xf32>
    %45 = arith.addf %44, %36 : vector<256x1xf32>
    %46 = vector.extract_strided_slice %37 {offsets = [0, 2], sizes = [256, 1], strides = [1, 1]} : vector<256x4xf32> to vector<256x1xf32>
    %47 = math.exp %46 : vector<256x1xf32>
    %48 = vector.broadcast %2 : f32 to vector<256x1xf32>
    %49 = arith.mulf %47, %48 : vector<256x1xf32>
    %50 = vector.extract_strided_slice %37 {offsets = [0, 3], sizes = [256, 1], strides = [1, 1]} : vector<256x4xf32> to vector<256x1xf32>
    %51 = math.exp %50 : vector<256x1xf32>
    %52 = vector.broadcast %2 : f32 to vector<256x1xf32>
    %53 = arith.mulf %51, %52 : vector<256x1xf32>
    %cst_10 = arith.constant 5.000000e-01 : f32
    %54 = vector.broadcast %cst_10 : f32 to vector<256x1xf32>
    %55 = arith.mulf %54, %49 : vector<256x1xf32>
    %56 = arith.subf %41, %55 : vector<256x1xf32>
    %cst_11 = arith.constant 5.000000e-01 : f32
    %57 = vector.broadcast %cst_11 : f32 to vector<256x1xf32>
    %58 = arith.mulf %57, %53 : vector<256x1xf32>
    %59 = arith.subf %45, %58 : vector<256x1xf32>
    %cst_12 = arith.constant 5.000000e-01 : f32
    %60 = vector.broadcast %cst_12 : f32 to vector<256x1xf32>
    %61 = arith.mulf %60, %49 : vector<256x1xf32>
    %62 = arith.addf %41, %61 : vector<256x1xf32>
    %cst_13 = arith.constant 5.000000e-01 : f32
    %63 = vector.broadcast %cst_13 : f32 to vector<256x1xf32>
    %64 = arith.mulf %63, %53 : vector<256x1xf32>
    %65 = arith.addf %45, %64 : vector<256x1xf32>
    %66 = tpu.concatenate %56, %59, %62, %65 in 1 : vector<256x1xf32>, vector<256x1xf32>, vector<256x1xf32>, vector<256x1xf32> -> vector<256x4xf32>
    %c0_14 = arith.constant 0 : index
    %c0_15 = arith.constant 0 : index
    %67 = vector.load %arg8[%c0_14, %c0_15] : memref<256x32xf32, #tpu.memory_space<vmem>>, vector<256x32xf32>
    tpu.vector_store %arg8[%c0_14, %c0_15], %16 {strides = array<i32>} : memref<256x32xf32, #tpu.memory_space<vmem>>, vector<256x32xf32>,
    %c0_16 = arith.constant 0 : index
    %c25 = arith.constant 25 : index
    %68 = vector.load %arg8[%c0_16, %c25] : memref<256x32xf32, #tpu.memory_space<vmem>>, vector<256x4xf32>
    tpu.vector_store %arg8[%c0_16, %c25], %66 {strides = array<i32>} : memref<256x32xf32, #tpu.memory_space<vmem>>, vector<256x4xf32>,
    return
  }
  func.func @transform_0(%arg0: i32, %arg1: memref<4xi32, #tpu.memory_space<smem>>, %arg2: memref<4xi32, #tpu.memory_space<smem>>, %arg3: memref<4xi32, #tpu.memory_space<smem>>, %arg4: memref<4xi32, #tpu.memory_space<smem>>) -> (i32, i32) {
    %c0_i32 = arith.constant 0 : i32
    %c0_i32_0 = arith.constant 0 : i32
    return %arg0, %c0_i32 : i32, i32
  }
  func.func @transform_1(%arg0: i32, %arg1: memref<4xi32, #tpu.memory_space<smem>>, %arg2: memref<4xi32, #tpu.memory_space<smem>>, %arg3: memref<4xi32, #tpu.memory_space<smem>>, %arg4: memref<4xi32, #tpu.memory_space<smem>>) -> (i32, i32, i32) {
    %0 = arith.index_cast %arg0 : i32 to index
    %1 = memref.load %arg4[%0] : memref<4xi32, #tpu.memory_space<smem>>
    %c0_i32 = arith.constant 0 : i32
    %c0_i32_0 = arith.constant 0 : i32
    %c0_i32_1 = arith.constant 0 : i32
    return %1, %c0_i32, %c0_i32_0 : i32, i32, i32
  }
  func.func @transform_2(%arg0: i32, %arg1: memref<4xi32, #tpu.memory_space<smem>>, %arg2: memref<4xi32, #tpu.memory_space<smem>>, %arg3: memref<4xi32, #tpu.memory_space<smem>>, %arg4: memref<4xi32, #tpu.memory_space<smem>>) -> (i32, i32, i32) {
    %0 = arith.index_cast %arg0 : i32 to index
    %1 = memref.load %arg4[%0] : memref<4xi32, #tpu.memory_space<smem>>
    %c0_i32 = arith.constant 0 : i32
    %c0_i32_0 = arith.constant 0 : i32
    %c0_i32_1 = arith.constant 0 : i32
    return %1, %c0_i32, %c0_i32_0 : i32, i32, i32
  }
  func.func @transform_3(%arg0: i32, %arg1: memref<4xi32, #tpu.memory_space<smem>>, %arg2: memref<4xi32, #tpu.memory_space<smem>>, %arg3: memref<4xi32, #tpu.memory_space<smem>>, %arg4: memref<4xi32, #tpu.memory_space<smem>>) -> (i32, i32) {
    %c0_i32 = arith.constant 0 : i32
    %c0_i32_0 = arith.constant 0 : i32
    return %arg0, %c0_i32 : i32, i32
  }
}

</mosaic_0001>

<llo_original>
// kernel: tpu_custom_call.1
$region0: #{tpu_custom_call.1}
  #allocation0 [shape = 'u32[]', space=smem, size = 0x4, offset = 0x4, fixed_abs, tag = 'smem constant byte address 0x4 - core index']
  #allocation1 [shape = 'u32[144,128]{1,0:T(1,128)}', space=vmem, size = 0x12000, scoped, tag = 'internal scratch']
  #allocation2 [shape = 's32[1]{0}', space=sflag, size = 0x4, scoped, tag = 'scoped memory for tpu_custom_call.1']
  #allocation3 [shape = 'u8[512]{0}', space=smem, size = 0x200, scoped, tag = 'prefetched SMEM operand 0']
  #allocation4 [shape = 'u8[512]{0}', space=smem, size = 0x200, scoped, tag = 'prefetched SMEM operand 1']
  #allocation5 [shape = 'u8[512]{0}', space=smem, size = 0x200, scoped, tag = 'prefetched SMEM operand 2']
  #allocation6 [shape = 'u8[512]{0}', space=smem, size = 0x200, scoped, tag = 'prefetched SMEM operand 3']
  %s0 = inlined_call_operand.vmem [shape: s32[4], index: 0, kind: input, shape index: {}]
  %s1 = inlined_call_operand.vmem [shape: s32[4], index: 1, kind: input, shape index: {}]
  %s2 = inlined_call_operand.vmem [shape: s32[4], index: 2, kind: input, shape index: {}]
  %s3 = inlined_call_operand.vmem [shape: s32[4], index: 3, kind: input, shape index: {}]
  %s4 = inlined_call_operand.vmem [shape: f32[1024,64], index: 4, kind: input, shape index: {}]
  %s5 = inlined_call_operand.vmem [shape: f32[2,64,32], index: 5, kind: input, shape index: {}]
  %s6 = inlined_call_operand.vmem [shape: f32[2,1,32], index: 6, kind: input, shape index: {}]
  %s7 = inlined_call_operand.vmem [shape: f32[1024,32], index: 7, kind: output, shape index: {}]
  %s8 = sld [smem:[#allocation0]]
  $region45: #{tpu_custom_call.1} parent=0
    _
  %s10 = ssub.s32 1, %s8
  %s11 = scalar_select 0, %s10, %s8
  %s12 = sshll.u32 %s0, 4
  %s13 = int_to_ptr.vmem [resolvable:$true] %s12
  %15 = dma.vmem_to_smem %s13, 16, [#allocation3], [#allocation2]
  %s16 = sshll.u32 %s1, 4
  %s17 = int_to_ptr.vmem [resolvable:$true] %s16
  %19 = dma.vmem_to_smem %s17, 16, [#allocation4], [#allocation2]
  %s20 = sshll.u32 %s2, 4
  %s21 = int_to_ptr.vmem [resolvable:$true] %s20
  %23 = dma.vmem_to_smem %s21, 16, [#allocation5], [#allocation2]
  %s24 = sshll.u32 %s3, 4
  %s25 = int_to_ptr.vmem [resolvable:$true] %s24
  %27 = dma.vmem_to_smem %s25, 16, [#allocation6], [#allocation2]
  %28 = dma.done [#allocation2], 64
  %29 = sfence
  loop: start=0, step=1, limit=6
  $region2: #{tpu_custom_call.1} parent=0 // loop_pre_header
    _
  $region3: #{tpu_custom_call.1} parent=0 // loop_header
    %s31 = sphi 0, %s35
    %p32 = scmp.ge.s32.totalorder %s31, 6
    %s41 = sphi 0, %s43
    %s44 = sphi 0, %s41
    %s45 = sphi 0, %s44
    %s61 = sphi 0, %s45
    %s69 = sphi 0, %s71
    %s72 = sphi 0, %s69
    %s73 = sphi 0, %s72
    %s89 = sphi 0, %s73
    %s97 = sphi 0, %s99
    %s100 = sphi 0, %s97
    %s101 = sphi 0, %s100
    %s117 = sphi 0, %s101
    %s123 = sphi 0, %s125
    %s126 = sphi 0, %s123
    %s127 = sphi 0, %s126
    %s143 = sphi 0, %s127
  $region4: #{tpu_custom_call.1} parent=0 // loop_header_branch
    %34 = sbr.rel (%p32) target = $region8
  $region5: #{tpu_custom_call.1} parent=0 // loop_body
    %s36 = ssub.s32 %s31, 1
    %s37 = ssub.s32 %s31, 2
    %s38 = sadd.s32 %s31, 1
    %s39 = ssub.s32 %s31, %s38
    %p40 = scmp.eq.s32.totalorder %s39, 0
    %s42 = sadd.s32 %s41, 1
    %s43 = scalar_select %p40, %s41, %s42
    %p46 = pneg %p40
    %p47 = scmp.eq.s32.totalorder %s31, 3
    %p48 = por %p46, %p47
    %p49 = scmp.ne.s32.totalorder %s41, %s44
    %p50 = scmp.eq.s32.totalorder %s31, 0
    %p51 = por %p49, %p50
    %p52 = scmp.ne.s32.totalorder %s41, %s44
    %p53 = scmp.eq.s32.totalorder %s36, 3
    %p54 = por %p52, %p53
    %p55 = scmp.ne.s32.totalorder %s44, %s45
    %p56 = scmp.eq.s32.totalorder %s36, 0
    %p57 = por %p55, %p56
    %p58 = scmp.ne.s32.totalorder %s44, %s45
    %p59 = scmp.eq.s32.totalorder %s37, 3
    %p60 = por %p58, %p59
    %p62 = scmp.ne.s32.totalorder %s45, %s61
    %p63 = scmp.eq.s32.totalorder %s37, 0
    %p64 = por %p62, %p63
    %s65 = sld [smem:[#allocation6 + %s31]]
    %s66 = sld [smem:[#allocation6 + %s38]]
    %s67 = ssub.s32 %s65, %s66
    %p68 = scmp.eq.s32.totalorder %s67, 0
    %s70 = sadd.s32 %s69, 1
    %s71 = scalar_select %p68, %s69, %s70
    %p74 = pneg %p68
    %p75 = scmp.eq.s32.totalorder %s31, 3
    %p76 = por %p74, %p75
    %p77 = scmp.ne.s32.totalorder %s69, %s72
    %p78 = scmp.eq.s32.totalorder %s31, 0
    %p79 = por %p77, %p78
    %p80 = scmp.ne.s32.totalorder %s69, %s72
    %p81 = scmp.eq.s32.totalorder %s36, 3
    %p82 = por %p80, %p81
    %p83 = scmp.ne.s32.totalorder %s72, %s73
    %p84 = scmp.eq.s32.totalorder %s36, 0
    %p85 = por %p83, %p84
    %p86 = scmp.ne.s32.totalorder %s72, %s73
    %p87 = scmp.eq.s32.totalorder %s37, 3
    %p88 = por %p86, %p87
    %p90 = scmp.ne.s32.totalorder %s73, %s89
    %p91 = scmp.eq.s32.totalorder %s37, 0
    %p92 = por %p90, %p91
    %s93 = sld [smem:[#allocation6 + %s31]]
    %s94 = sld [smem:[#allocation6 + %s38]]
    %s95 = ssub.s32 %s93, %s94
    %p96 = scmp.eq.s32.totalorder %s95, 0
    %s98 = sadd.s32 %s97, 1
    %s99 = scalar_select %p96, %s97, %s98
    %p102 = pneg %p96
    %p103 = scmp.eq.s32.totalorder %s31, 3
    %p104 = por %p102, %p103
    %p105 = scmp.ne.s32.totalorder %s97, %s100
    %p106 = scmp.eq.s32.totalorder %s31, 0
    %p107 = por %p105, %p106
    %p108 = scmp.ne.s32.totalorder %s97, %s100
    %p109 = scmp.eq.s32.totalorder %s36, 3
    %p110 = por %p108, %p109
    %p111 = scmp.ne.s32.totalorder %s100, %s101
    %p112 = scmp.eq.s32.totalorder %s36, 0
    %p113 = por %p111, %p112
    %p114 = scmp.ne.s32.totalorder %s100, %s101
    %p115 = scmp.eq.s32.totalorder %s37, 3
    %p116 = por %p114, %p115
    %p118 = scmp.ne.s32.totalorder %s101, %s117
    %p119 = scmp.eq.s32.totalorder %s37, 0
    %p120 = por %p118, %p119
    %s121 = ssub.s32 %s31, %s38
    %p122 = scmp.eq.s32.totalorder %s121, 0
    %s124 = sadd.s32 %s123, 1
    %s125 = scalar_select %p122, %s123, %s124
    %p128 = pneg %p122
    %p129 = scmp.eq.s32.totalorder %s31, 3
    %p130 = por %p128, %p129
    %p131 = scmp.ne.s32.totalorder %s123, %s126
    %p132 = scmp.eq.s32.totalorder %s31, 0
    %p133 = por %p131, %p132
    %p134 = scmp.ne.s32.totalorder %s123, %s126
    %p135 = scmp.eq.s32.totalorder %s36, 3
    %p136 = por %p134, %p135
    %p137 = scmp.ne.s32.totalorder %s126, %s127
    %p138 = scmp.eq.s32.totalorder %s36, 0
    %p139 = por %p137, %p138
    %p140 = scmp.ne.s32.totalorder %s126, %s127
    %p141 = scmp.eq.s32.totalorder %s37, 3
    %p142 = por %p140, %p141
    %p144 = scmp.ne.s32.totalorder %s127, %s143
    %p145 = scmp.eq.s32.totalorder %s37, 0
    %p146 = por %p144, %p145
    %p147 = scmp.le.s32.totalorder 1, %s31
    %p148 = scmp.lt.s32.totalorder %s31, 5
    %p149 = pnand %p147, %p148
    %p150 = pneg %p149
    // Predicated region
    $region9: #{tpu_custom_call.1} parent=5 // pred_check
      _
    $region10: #{tpu_custom_call.1} parent=5 // pred_check_branch
      %152 = sbr.rel (%p149) target = $region12
    $region11: #{tpu_custom_call.1} parent=5 // pred_region
      %s153 = ssub.s32 %s31, 1
    $region12: #{tpu_custom_call.1} parent=5 // pred_fallthru
      _
    %p154 = scmp.lt.s32.totalorder %s31, 4
    // Predicated region
    $region13: #{tpu_custom_call.1} parent=5 // pred_check
      %p155 = pneg %p154
    $region14: #{tpu_custom_call.1} parent=5 // pred_check_branch
      %157 = sbr.rel (%p155) target = $region16
    $region15: #{tpu_custom_call.1} parent=5 // pred_region
      // Predicated region
      $region17: #{tpu_custom_call.1} parent=15 // pred_check
        %p158 = pneg %p51
      $region18: #{tpu_custom_call.1} parent=15 // pred_check_branch
        %160 = sbr.rel (%p158) target = $region20
      $region19: #{tpu_custom_call.1} parent=15 // pred_region
        %s161 = smul.u32 32, %s31
        %p162 = scmp.lt.s32.totalorder %s161, 127
        %s163 = scalar_select %p162, %s161, 127
        %s164 = smul.addr %s163, 8
        %s165 = scalar_lea.vmem %s4, %s164
        %s166 = smul.u32 32, %s31
      $region20: #{tpu_custom_call.1} parent=15 // pred_fallthru
        _
      // Predicated region
      $region21: #{tpu_custom_call.1} parent=15 // pred_check
        %p167 = pneg %p79
      $region22: #{tpu_custom_call.1} parent=15 // pred_check_branch
        %169 = sbr.rel (%p167) target = $region24
      $region23: #{tpu_custom_call.1} parent=15 // pred_region
        %s170 = sld [smem:[#allocation6 + %s31]]
        %p171 = scmp.lt.s32.totalorder %s170, 1
        %s172 = scalar_select %p171, %s170, 1
        %s173 = smul.addr %s172, 8
        %s174 = smul.addr %s173, 8
        %s175 = scalar_lea.vmem %s5, %s174
        %s176 = sld [smem:[#allocation6 + %s31]]
      $region24: #{tpu_custom_call.1} parent=15 // pred_fallthru
        _
      // Predicated region
      $region25: #{tpu_custom_call.1} parent=15 // pred_check
        %p177 = pneg %p107
      $region26: #{tpu_custom_call.1} parent=15 // pred_check_branch
        %179 = sbr.rel (%p177) target = $region28
      $region27: #{tpu_custom_call.1} parent=15 // pred_region
        %s180 = sld [smem:[#allocation6 + %s31]]
        %p181 = scmp.lt.s32.totalorder %s180, 1
        %s182 = scalar_select %p181, %s180, 1
        %s183 = scalar_lea.vmem %s6, %s182
        %s184 = sld [smem:[#allocation6 + %s31]]
      $region28: #{tpu_custom_call.1} parent=15 // pred_fallthru
        _
    $region16: #{tpu_custom_call.1} parent=5 // pred_fallthru
      _
    %p185 = scmp.le.s32.totalorder 1, %s31
    %p186 = scmp.lt.s32.totalorder %s31, 5
    %p187 = pnand %p185, %p186
    %p188 = pneg %p187
    // Predicated region
    $region29: #{tpu_custom_call.1} parent=5 // pred_check
      _
    $region30: #{tpu_custom_call.1} parent=5 // pred_check_branch
      %190 = sbr.rel (%p187) target = $region32
    $region31: #{tpu_custom_call.1} parent=5 // pred_region
      %s191 = ssub.s32 %s31, 1
      %s192 = smul.u32 32, %s36
      %p193 = scmp.lt.s32.totalorder %s192, 127
      %s194 = scalar_select %p193, %s192, 127
      %s195 = smul.addr %s194, 8
      %s196 = scalar_lea.vmem %s4, %s195
      %p197 = pneg %p57
      %p198 = pneg %p54
      %s199 = sld [smem:[#allocation6 + %s36]]
      %p200 = scmp.lt.s32.totalorder %s199, 1
      %s201 = scalar_select %p200, %s199, 1
      %s202 = smul.addr %s201, 8
      %s203 = smul.addr %s202, 8
      %s204 = scalar_lea.vmem %s5, %s203
      %p205 = pneg %p85
      %p206 = pneg %p82
      %s207 = sld [smem:[#allocation6 + %s36]]
      %p208 = scmp.lt.s32.totalorder %s207, 1
      %s209 = scalar_select %p208, %s207, 1
      %s210 = scalar_lea.vmem %s6, %s209
      %p211 = pneg %p113
      %p212 = pneg %p110
      %p213 = pneg %p139
      %p214 = pneg %p136
      %s215 = smul.u32 32, %s36
      %p216 = scmp.lt.s32.totalorder %s215, 127
      %s217 = scalar_select %p216, %s215, 127
      %s218 = smul.addr %s217, 8
      %s219 = scalar_lea.vmem %s7, %s218
      %s220 = smul.u32 32, %s36
      %p221 = scmp.lt.s32.totalorder %s220, 127
      %s222 = scalar_select %p221, %s220, 127
      %s223 = smul.addr %s222, 8
      %s224 = scalar_lea.vmem %s4, %s223
      %s225 = smul.u32 32, %s36
      %s226 = sld [smem:[#allocation6 + %s36]]
      %p227 = scmp.lt.s32.totalorder %s226, 1
      %s228 = scalar_select %p227, %s226, 1
      %s229 = smul.addr %s228, 8
      %s230 = smul.addr %s229, 8
      %s231 = scalar_lea.vmem %s5, %s230
      %s232 = sld [smem:[#allocation6 + %s36]]
      %s233 = sld [smem:[#allocation6 + %s36]]
      %p234 = scmp.lt.s32.totalorder %s233, 1
      %s235 = scalar_select %p234, %s233, 1
      %s236 = scalar_lea.vmem %s6, %s235
      %s237 = sld [smem:[#allocation6 + %s36]]
      %s238 = smul.u32 32, %s36
      %p239 = scmp.lt.s32.totalorder %s238, 127
      %s240 = scalar_select %p239, %s238, 127
      %s241 = smul.addr %s240, 8
      %s242 = scalar_lea.vmem %s7, %s241
      %s243 = smul.u32 32, %s36
      %s244 = sld [smem:[#allocation3 + %s36]]
      %s245 = scvt.s32.f32 %s244
      %s246 = sld [smem:[#allocation4 + %s36]]
      %s247 = scvt.s32.f32 %s246
      %s248 = sld [smem:[#allocation5 + %s36]]
      %s249 = scvt.s32.f32 %s248
      %v250 = vld [vmem:[%s224] sm:$0xff]
      %v251 = vld [vmem:[%s224 + $0x8] sm:$0xff]
      %v252 = vld [vmem:[%s224 + $0x10] sm:$0xff]
      %v253 = vld [vmem:[%s224 + $0x18] sm:$0xff]
      %v254 = vld [vmem:[%s224 + $0x20] sm:$0xff]
      %v255 = vld [vmem:[%s224 + $0x28] sm:$0xff]
      %v256 = vld [vmem:[%s224 + $0x30] sm:$0xff]
      %v257 = vld [vmem:[%s224 + $0x38] sm:$0xff]
      %v258 = vld [vmem:[%s224 + $0x40] sm:$0xff]
      %v259 = vld [vmem:[%s224 + $0x48] sm:$0xff]
      %v260 = vld [vmem:[%s224 + $0x50] sm:$0xff]
      %v261 = vld [vmem:[%s224 + $0x58] sm:$0xff]
      %v262 = vld [vmem:[%s224 + $0x60] sm:$0xff]
      %v263 = vld [vmem:[%s224 + $0x68] sm:$0xff]
      %v264 = vld [vmem:[%s224 + $0x70] sm:$0xff]
      %v265 = vld [vmem:[%s224 + $0x78] sm:$0xff]
      %v266 = vld [vmem:[%s224 + $0x80] sm:$0xff]
      %v267 = vld [vmem:[%s224 + $0x88] sm:$0xff]
      %v268 = vld [vmem:[%s224 + $0x90] sm:$0xff]
      %v269 = vld [vmem:[%s224 + $0x98] sm:$0xff]
      %v270 = vld [vmem:[%s224 + $0xa0] sm:$0xff]
      %v271 = vld [vmem:[%s224 + $0xa8] sm:$0xff]
      %v272 = vld [vmem:[%s224 + $0xb0] sm:$0xff]
      %v273 = vld [vmem:[%s224 + $0xb8] sm:$0xff]
      %v274 = vld [vmem:[%s224 + $0xc0] sm:$0xff]
      %v275 = vld [vmem:[%s224 + $0xc8] sm:$0xff]
      %v276 = vld [vmem:[%s224 + $0xd0] sm:$0xff]
      %v277 = vld [vmem:[%s224 + $0xd8] sm:$0xff]
      %v278 = vld [vmem:[%s224 + $0xe0] sm:$0xff]
      %v279 = vld [vmem:[%s224 + $0xe8] sm:$0xff]
      %v280 = vld [vmem:[%s224 + $0xf0] sm:$0xff]
      %v281 = vld [vmem:[%s224 + $0xf8] sm:$0xff]
      %v282 = vld [vmem:[%s231] sm:$0xff]
      %v283 = vld [vmem:[%s231 + $0x8] sm:$0xff]
      %v284 = vld [vmem:[%s231 + $0x10] sm:$0xff]
      %v285 = vld [vmem:[%s231 + $0x18] sm:$0xff]
      %v286 = vld [vmem:[%s231 + $0x20] sm:$0xff]
      %v287 = vld [vmem:[%s231 + $0x28] sm:$0xff]
      %v288 = vld [vmem:[%s231 + $0x30] sm:$0xff]
      %v289 = vld [vmem:[%s231 + $0x38] sm:$0xff]
      %v290 = vld [vmem:[%s236] sm:$0x1]
      %v292 = vlaneseq
      %v293 = vshrl.u32 %v292, 7
      %v294 = vsub.s32 0, %v293
      %v295 = vrot.slane %v290, %v294
      %vm297 = vcmask 523264
      %v299 = vsel %vm297, %v250, 0
      %v302 = vsel %vm297, %v251, 0
      %v305 = vsel %vm297, %v252, 0
      %v308 = vsel %vm297, %v253, 0
      %v311 = vsel %vm297, %v254, 0
      %v314 = vsel %vm297, %v255, 0
      %v317 = vsel %vm297, %v256, 0
      %v320 = vsel %vm297, %v257, 0
      %v323 = vsel %vm297, %v258, 0
      %v326 = vsel %vm297, %v259, 0
      %v329 = vsel %vm297, %v260, 0
      %v332 = vsel %vm297, %v261, 0
      %v335 = vsel %vm297, %v262, 0
      %v338 = vsel %vm297, %v263, 0
      %v341 = vsel %vm297, %v264, 0
      %v344 = vsel %vm297, %v265, 0
      %v347 = vsel %vm297, %v266, 0
      %v350 = vsel %vm297, %v267, 0
      %v353 = vsel %vm297, %v268, 0
      %v356 = vsel %vm297, %v269, 0
      %v359 = vsel %vm297, %v270, 0
      %v362 = vsel %vm297, %v271, 0
      %v365 = vsel %vm297, %v272, 0
      %v368 = vsel %vm297, %v273, 0
      %v371 = vsel %vm297, %v274, 0
      %v374 = vsel %vm297, %v275, 0
      %v377 = vsel %vm297, %v276, 0
      %v380 = vsel %vm297, %v277, 0
      %v383 = vsel %vm297, %v278, 0
      %v386 = vsel %vm297, %v279, 0
      %v389 = vsel %vm297, %v280, 0
      %v392 = vsel %vm297, %v281, 0
      %394 = vmatprep.subr.mxu0 0.0
      %395 = vmatpush1.msra.mxu0 %v282
      %396 = vmatprep.subr.mxu0 0.0
      %397 = vmatpush1.msra.mxu0 %v283
      %398 = vmatprep.subr.mxu0 0.0
      %399 = vmatpush1.msra.mxu0 %v284
      %400 = vmatprep.subr.mxu0 0.0
      %401 = vmatpush1.msra.mxu0 %v285
      %402 = vmatprep.subr.mxu0 0.0
      %403 = vmatpush1.msra.mxu0 %v286
      %404 = vmatprep.subr.mxu0 0.0
      %405 = vmatpush1.msra.mxu0 %v287
      %406 = vmatprep.subr.mxu0 0.0
      %407 = vmatpush1.msra.mxu0 %v288
      %408 = vmatprep.subr.mxu0 0.0
      %409 = vmatpush1.msra.mxu0 %v289
      %410 = vmatprep.subr.mxu0 0.0
      %411 = vmatpush1.msra.mxu0 0.0
      %412 = vmatprep.subr.mxu0 0.0
      %413 = vmatpush1.msra.mxu0 0.0
      %414 = vmatprep.subr.mxu0 0.0
      %415 = vmatpush1.msra.mxu0 0.0
      %416 = vmatprep.subr.mxu0 0.0
      %417 = vmatpush1.msra.mxu0 0.0
      %418 = vmatprep.subr.mxu0 0.0
      %419 = vmatpush1.msra.mxu0 0.0
      %420 = vmatprep.subr.mxu0 0.0
      %421 = vmatpush1.msra.mxu0 0.0
      %422 = vmatprep.subr.mxu0 0.0
      %423 = vmatpush1.msra.mxu0 0.0
      %424 = vmatprep.subr.mxu0 0.0
      %425 = vmatpush1.msra.mxu0 0.0
      %426 = vmatprep.subr.mxu0 0.0
      %427 = vmatpush1.msra.mxu0 0.0
      %428 = vmatprep.subr.mxu0 0.0
      %429 = vmatpush1.msra.mxu0 0.0
      %430 = vmatprep.subr.mxu0 0.0
      %431 = vmatpush1.msra.mxu0 0.0
      %432 = vmatprep.subr.mxu0 0.0
      %433 = vmatpush1.msra.mxu0 0.0
      %434 = vmatprep.subr.mxu0 0.0
      %435 = vmatpush1.msra.mxu0 0.0
      %436 = vmatprep.subr.mxu0 0.0
      %437 = vmatpush1.msra.mxu0 0.0
      %438 = vmatprep.subr.mxu0 0.0
      %439 = vmatpush1.msra.mxu0 0.0
      %440 = vmatprep.subr.mxu0 0.0
      %441 = vmatpush1.msra.mxu0 0.0
      %442 = vmatprep.subr.mxu0 0.0
      %443 = vmatpush1.msra.mxu0 0.0
      %444 = vmatprep.subr.mxu0 0.0
      %445 = vmatpush1.msra.mxu0 0.0
      %446 = vmatprep.subr.mxu0 0.0
      %447 = vmatpush1.msra.mxu0 0.0
      %448 = vmatprep.subr.mxu0 0.0
      %449 = vmatpush1.msra.mxu0 0.0
      %450 = vmatprep.subr.mxu0 0.0
      %451 = vmatpush1.msra.mxu0 0.0
      %452 = vmatprep.subr.mxu0 0.0
      %453 = vmatpush1.msra.mxu0 0.0
      %454 = vmatprep.subr.mxu0 0.0
      %455 = vmatpush1.msra.mxu0 0.0
      %456 = vmatprep.subr.mxu0 0.0
      %457 = vmatpush1.msra.mxu0 0.0
      %458 = vmatprep.mubr.f32.mxu0 0.0
      %459 = vmatmul.mubr.f32.gmra.mrb[0].mxu0 %v299
      %v460 = vpop.f32.mrb[0].mxu0
      %v461 = vadd.f32 %v295, %v460
      %v462 = vpop.f32.mrb[0].mxu0
      %463 = vmatprep.mubr.f32.mxu0 0.0
      %464 = vmatmul.mubr.f32.gmra.mrb[0].mxu0 %v302
      %v465 = vpop.f32.mrb[0].mxu0
      %v466 = vadd.f32 %v295, %v465
      %v467 = vpop.f32.mrb[0].mxu0
      %468 = vmatprep.mubr.f32.mxu0 0.0
      %469 = vmatmul.mubr.f32.gmra.mrb[0].mxu0 %v305
      %v470 = vpop.f32.mrb[0].mxu0
      %v471 = vadd.f32 %v295, %v470
      %v472 = vpop.f32.mrb[0].mxu0
      %473 = vmatprep.mubr.f32.mxu0 0.0
      %474 = vmatmul.mubr.f32.gmra.mrb[0].mxu0 %v308
      %v475 = vpop.f32.mrb[0].mxu0
      %v476 = vadd.f32 %v295, %v475
      %v477 = vpop.f32.mrb[0].mxu0
      %478 = vmatprep.mubr.f32.mxu0 0.0
      %479 = vmatmul.mubr.f32.gmra.mrb[0].mxu0 %v311
      %v480 = vpop.f32.mrb[0].mxu0
      %v481 = vadd.f32 %v295, %v480
      %v482 = vpop.f32.mrb[0].mxu0
      %483 = vmatprep.mubr.f32.mxu0 0.0
      %484 = vmatmul.mubr.f32.gmra.mrb[0].mxu0 %v314
      %v485 = vpop.f32.mrb[0].mxu0
      %v486 = vadd.f32 %v295, %v485
      %v487 = vpop.f32.mrb[0].mxu0
      %488 = vmatprep.mubr.f32.mxu0 0.0
      %489 = vmatmul.mubr.f32.gmra.mrb[0].mxu0 %v317
      %v490 = vpop.f32.mrb[0].mxu0
      %v491 = vadd.f32 %v295, %v490
      %v492 = vpop.f32.mrb[0].mxu0
      %493 = vmatprep.mubr.f32.mxu0 0.0
      %494 = vmatmul.mubr.f32.gmra.mrb[0].mxu0 %v320
      %v495 = vpop.f32.mrb[0].mxu0
      %v496 = vadd.f32 %v295, %v495
      %v497 = vpop.f32.mrb[0].mxu0
      %498 = vmatprep.mubr.f32.mxu0 0.0
      %499 = vmatmul.mubr.f32.gmra.mrb[0].mxu0 %v323
      %v500 = vpop.f32.mrb[0].mxu0
      %v501 = vadd.f32 %v295, %v500
      %v502 = vpop.f32.mrb[0].mxu0
      %503 = vmatprep.mubr.f32.mxu0 0.0
      %504 = vmatmul.mubr.f32.gmra.mrb[0].mxu0 %v326
      %v505 = vpop.f32.mrb[0].mxu0
      %v506 = vadd.f32 %v295, %v505
      %v507 = vpop.f32.mrb[0].mxu0
      %508 = vmatprep.mubr.f32.mxu0 0.0
      %509 = vmatmul.mubr.f32.gmra.mrb[0].mxu0 %v329
      %v510 = vpop.f32.mrb[0].mxu0
      %v511 = vadd.f32 %v295, %v510
      %v512 = vpop.f32.mrb[0].mxu0
      %513 = vmatprep.mubr.f32.mxu0 0.0
      %514 = vmatmul.mubr.f32.gmra.mrb[0].mxu0 %v332
      %v515 = vpop.f32.mrb[0].mxu0
      %v516 = vadd.f32 %v295, %v515
      %v517 = vpop.f32.mrb[0].mxu0
      %518 = vmatprep.mubr.f32.mxu0 0.0
      %519 = vmatmul.mubr.f32.gmra.mrb[0].mxu0 %v335
      %v520 = vpop.f32.mrb[0].mxu0
      %v521 = vadd.f32 %v295, %v520
      %v522 = vpop.f32.mrb[0].mxu0
      %523 = vmatprep.mubr.f32.mxu0 0.0
      %524 = vmatmul.mubr.f32.gmra.mrb[0].mxu0 %v338
      %v525 = vpop.f32.mrb[0].mxu0
      %v526 = vadd.f32 %v295, %v525
      %v527 = vpop.f32.mrb[0].mxu0
      %528 = vmatprep.mubr.f32.mxu0 0.0
      %529 = vmatmul.mubr.f32.gmra.mrb[0].mxu0 %v341
      %v530 = vpop.f32.mrb[0].mxu0
      %v531 = vadd.f32 %v295, %v530
      %v532 = vpop.f32.mrb[0].mxu0
      %533 = vmatprep.mubr.f32.mxu0 0.0
      %534 = vmatmul.mubr.f32.gmra.mrb[0].mxu0 %v344
      %v535 = vpop.f32.mrb[0].mxu0
      %v536 = vadd.f32 %v295, %v535
      %v537 = vpop.f32.mrb[0].mxu0
      %538 = vmatprep.mubr.f32.mxu0 0.0
      %539 = vmatmul.mubr.f32.gmra.mrb[0].mxu0 %v347
      %v540 = vpop.f32.mrb[0].mxu0
      %v541 = vadd.f32 %v295, %v540
      %v542 = vpop.f32.mrb[0].mxu0
      %543 = vmatprep.mubr.f32.mxu0 0.0
      %544 = vmatmul.mubr.f32.gmra.mrb[0].mxu0 %v350
      %v545 = vpop.f32.mrb[0].mxu0
      %v546 = vadd.f32 %v295, %v545
      %v547 = vpop.f32.mrb[0].mxu0
      %548 = vmatprep.mubr.f32.mxu0 0.0
      %549 = vmatmul.mubr.f32.gmra.mrb[0].mxu0 %v353
      %v550 = vpop.f32.mrb[0].mxu0
      %v551 = vadd.f32 %v295, %v550
      %v552 = vpop.f32.mrb[0].mxu0
      %553 = vmatprep.mubr.f32.mxu0 0.0
      %554 = vmatmul.mubr.f32.gmra.mrb[0].mxu0 %v356
      %v555 = vpop.f32.mrb[0].mxu0
      %v556 = vadd.f32 %v295, %v555
      %v557 = vpop.f32.mrb[0].mxu0
      %558 = vmatprep.mubr.f32.mxu0 0.0
      %559 = vmatmul.mubr.f32.gmra.mrb[0].mxu0 %v359
      %v560 = vpop.f32.mrb[0].mxu0
      %v561 = vadd.f32 %v295, %v560
      %v562 = vpop.f32.mrb[0].mxu0
      %563 = vmatprep.mubr.f32.mxu0 0.0
      %564 = vmatmul.mubr.f32.gmra.mrb[0].mxu0 %v362
      %v565 = vpop.f32.mrb[0].mxu0
      %v566 = vadd.f32 %v295, %v565
      %v567 = vpop.f32.mrb[0].mxu0
      %568 = vmatprep.mubr.f32.mxu0 0.0
      %569 = vmatmul.mubr.f32.gmra.mrb[0].mxu0 %v365
      %v570 = vpop.f32.mrb[0].mxu0
      %v571 = vadd.f32 %v295, %v570
      %v572 = vpop.f32.mrb[0].mxu0
      %573 = vmatprep.mubr.f32.mxu0 0.0
      %574 = vmatmul.mubr.f32.gmra.mrb[0].mxu0 %v368
      %v575 = vpop.f32.mrb[0].mxu0
      %v576 = vadd.f32 %v295, %v575
      %v577 = vpop.f32.mrb[0].mxu0
      %578 = vmatprep.mubr.f32.mxu0 0.0
      %579 = vmatmul.mubr.f32.gmra.mrb[0].mxu0 %v371
      %v580 = vpop.f32.mrb[0].mxu0
      %v581 = vadd.f32 %v295, %v580
      %v582 = vpop.f32.mrb[0].mxu0
      %583 = vmatprep.mubr.f32.mxu0 0.0
      %584 = vmatmul.mubr.f32.gmra.mrb[0].mxu0 %v374
      %v585 = vpop.f32.mrb[0].mxu0
      %v586 = vadd.f32 %v295, %v585
      %v587 = vpop.f32.mrb[0].mxu0
      %588 = vmatprep.mubr.f32.mxu0 0.0
      %589 = vmatmul.mubr.f32.gmra.mrb[0].mxu0 %v377
      %v590 = vpop.f32.mrb[0].mxu0
      %v591 = vadd.f32 %v295, %v590
      %v592 = vpop.f32.mrb[0].mxu0
      %593 = vmatprep.mubr.f32.mxu0 0.0
      %594 = vmatmul.mubr.f32.gmra.mrb[0].mxu0 %v380
      %v595 = vpop.f32.mrb[0].mxu0
      %v596 = vadd.f32 %v295, %v595
      %v597 = vpop.f32.mrb[0].mxu0
      %598 = vmatprep.mubr.f32.mxu0 0.0
      %599 = vmatmul.mubr.f32.gmra.mrb[0].mxu0 %v383
      %v600 = vpop.f32.mrb[0].mxu0
      %v601 = vadd.f32 %v295, %v600
      %v602 = vpop.f32.mrb[0].mxu0
      %603 = vmatprep.mubr.f32.mxu0 0.0
      %604 = vmatmul.mubr.f32.gmra.mrb[0].mxu0 %v386
      %v605 = vpop.f32.mrb[0].mxu0
      %v606 = vadd.f32 %v295, %v605
      %v607 = vpop.f32.mrb[0].mxu0
      %608 = vmatprep.mubr.f32.mxu0 0.0
      %609 = vmatmul.mubr.f32.gmra.mrb[0].mxu0 %v389
      %v610 = vpop.f32.mrb[0].mxu0
      %v611 = vadd.f32 %v295, %v610
      %v612 = vpop.f32.mrb[0].mxu0
      %613 = vmatprep.mubr.f32.mxu0 0.0
      %614 = vmatmul.mubr.f32.gmra.mrb[0].mxu0 %v392
      %v615 = vpop.f32.mrb[0].mxu0
      %v616 = vadd.f32 %v295, %v615
      %v617 = vpop.f32.mrb[0].mxu0
      %618 = vdwg.mxu0
      %v619 = vlaneseq
      %v620 = vshrl.u32 %v619, 7
      %v621 = vadd.s32 %v620, 8
      %v622 = vadd.s32 %v620, 16
      %v623 = vadd.s32 %v620, 24
      %v624 = vadd.s32 %v620, 32
      %v625 = vadd.s32 %v620, 40
      %v626 = vadd.s32 %v620, 48
      %v627 = vadd.s32 %v620, 56
      %v628 = vadd.s32 %v620, 64
      %v629 = vadd.s32 %v620, 72
      %v630 = vadd.s32 %v620, 80
      %v631 = vadd.s32 %v620, 88
      %v632 = vadd.s32 %v620, 96
      %v633 = vadd.s32 %v620, 104
      %v634 = vadd.s32 %v620, 112
      %v635 = vadd.s32 %v620, 120
      %v636 = vadd.s32 %v620, 128
      %v637 = vadd.s32 %v620, 136
      %v638 = vadd.s32 %v620, 144
      %v639 = vadd.s32 %v620, 152
      %v640 = vadd.s32 %v620, 160
      %v641 = vadd.s32 %v620, 168
      %v642 = vadd.s32 %v620, 176
      %v643 = vadd.s32 %v620, 184
      %v644 = vadd.s32 %v620, 192
      %v645 = vadd.s32 %v620, 200
      %v646 = vadd.s32 %v620, 208
      %v647 = vadd.s32 %v620, 216
      %v648 = vadd.s32 %v620, 224
      %v649 = vadd.s32 %v620, 232
      %v650 = vadd.s32 %v620, 240
      %v651 = vadd.s32 %v620, 248
      %v652 = vcvt.s32.f32 %v620
      %v653 = vcvt.s32.f32 %v621
      %v654 = vcvt.s32.f32 %v622
      %v655 = vcvt.s32.f32 %v623
      %v656 = vcvt.s32.f32 %v624
      %v657 = vcvt.s32.f32 %v625
      %v658 = vcvt.s32.f32 %v626
      %v659 = vcvt.s32.f32 %v627
      %v660 = vcvt.s32.f32 %v628
      %v661 = vcvt.s32.f32 %v629
      %v662 = vcvt.s32.f32 %v630
      %v663 = vcvt.s32.f32 %v631
      %v664 = vcvt.s32.f32 %v632
      %v665 = vcvt.s32.f32 %v633
      %v666 = vcvt.s32.f32 %v634
      %v667 = vcvt.s32.f32 %v635
      %v668 = vcvt.s32.f32 %v636
      %v669 = vcvt.s32.f32 %v637
      %v670 = vcvt.s32.f32 %v638
      %v671 = vcvt.s32.f32 %v639
      %v672 = vcvt.s32.f32 %v640
      %v673 = vcvt.s32.f32 %v641
      %v674 = vcvt.s32.f32 %v642
      %v675 = vcvt.s32.f32 %v643
      %v676 = vcvt.s32.f32 %v644
      %v677 = vcvt.s32.f32 %v645
      %v678 = vcvt.s32.f32 %v646
      %v679 = vcvt.s32.f32 %v647
      %v680 = vcvt.s32.f32 %v648
      %v681 = vcvt.s32.f32 %v649
      %v682 = vcvt.s32.f32 %v650
      %v683 = vcvt.s32.f32 %v651
      %v684 = vstv %s249
      %v685 = vadd.f32 %v684, %v652
      %v686 = vadd.f32 %v684, %v653
      %v687 = vadd.f32 %v684, %v654
      %v688 = vadd.f32 %v684, %v655
      %v689 = vadd.f32 %v684, %v656
      %v690 = vadd.f32 %v684, %v657
      %v691 = vadd.f32 %v684, %v658
      %v692 = vadd.f32 %v684, %v659
      %v693 = vadd.f32 %v684, %v660
      %v694 = vadd.f32 %v684, %v661
      %v695 = vadd.f32 %v684, %v662
      %v696 = vadd.f32 %v684, %v663
      %v697 = vadd.f32 %v684, %v664
      %v698 = vadd.f32 %v684, %v665
      %v699 = vadd.f32 %v684, %v666
      %v700 = vadd.f32 %v684, %v667
      %v701 = vadd.f32 %v684, %v668
      %v702 = vadd.f32 %v684, %v669
      %v703 = vadd.f32 %v684, %v670
      %v704 = vadd.f32 %v684, %v671
      %v705 = vadd.f32 %v684, %v672
      %v706 = vadd.f32 %v684, %v673
      %v707 = vadd.f32 %v684, %v674
      %v708 = vadd.f32 %v684, %v675
      %v709 = vadd.f32 %v684, %v676
      %v710 = vadd.f32 %v684, %v677
      %v711 = vadd.f32 %v684, %v678
      %v712 = vadd.f32 %v684, %v679
      %v713 = vadd.f32 %v684, %v680
      %v714 = vadd.f32 %v684, %v681
      %v715 = vadd.f32 %v684, %v682
      %v716 = vadd.f32 %v684, %v683
      %v717 = vadd.f32 %v685, 0.5
      %v718 = vadd.f32 %v686, 0.5
      %v719 = vadd.f32 %v687, 0.5
      %v720 = vadd.f32 %v688, 0.5
      %v721 = vadd.f32 %v689, 0.5
      %v722 = vadd.f32 %v690, 0.5
      %v723 = vadd.f32 %v691, 0.5
      %v724 = vadd.f32 %v692, 0.5
      %v725 = vadd.f32 %v693, 0.5
      %v726 = vadd.f32 %v694, 0.5
      %v727 = vadd.f32 %v695, 0.5
      %v728 = vadd.f32 %v696, 0.5
      %v729 = vadd.f32 %v697, 0.5
      %v730 = vadd.f32 %v698, 0.5
      %v731 = vadd.f32 %v699, 0.5
      %v732 = vadd.f32 %v700, 0.5
      %v733 = vadd.f32 %v701, 0.5
      %v734 = vadd.f32 %v702, 0.5
      %v735 = vadd.f32 %v703, 0.5
      %v736 = vadd.f32 %v704, 0.5
      %v737 = vadd.f32 %v705, 0.5
      %v738 = vadd.f32 %v706, 0.5
      %v739 = vadd.f32 %v707, 0.5
      %v740 = vadd.f32 %v708, 0.5
      %v741 = vadd.f32 %v709, 0.5
      %v742 = vadd.f32 %v710, 0.5
      %v743 = vadd.f32 %v711, 0.5
      %v744 = vadd.f32 %v712, 0.5
      %v745 = vadd.f32 %v713, 0.5
      %v746 = vadd.f32 %v714, 0.5
      %v747 = vadd.f32 %v715, 0.5
      %v748 = vadd.f32 %v716, 0.5
      %v749 = vstv %s247
      %v750 = vrcp.pop %v749
      %v751 = vmul.f32 %v717, %v750
      %v752 = vmul.f32 %v718, %v750
      %v753 = vmul.f32 %v719, %v750
      %v754 = vmul.f32 %v720, %v750
      %v755 = vmul.f32 %v721, %v750
      %v756 = vmul.f32 %v722, %v750
      %v757 = vmul.f32 %v723, %v750
      %v758 = vmul.f32 %v724, %v750
      %v759 = vmul.f32 %v725, %v750
      %v760 = vmul.f32 %v726, %v750
      %v761 = vmul.f32 %v727, %v750
      %v762 = vmul.f32 %v728, %v750
      %v763 = vmul.f32 %v729, %v750
      %v764 = vmul.f32 %v730, %v750
      %v765 = vmul.f32 %v731, %v750
      %v766 = vmul.f32 %v732, %v750
      %v767 = vmul.f32 %v733, %v750
      %v768 = vmul.f32 %v734, %v750
      %v769 = vmul.f32 %v735, %v750
      %v770 = vmul.f32 %v736, %v750
      %v771 = vmul.f32 %v737, %v750
      %v772 = vmul.f32 %v738, %v750
      %v773 = vmul.f32 %v739, %v750
      %v774 = vmul.f32 %v740, %v750
      %v775 = vmul.f32 %v741, %v750
      %v776 = vmul.f32 %v742, %v750
      %v777 = vmul.f32 %v743, %v750
      %v778 = vmul.f32 %v744, %v750
      %v779 = vmul.f32 %v745, %v750
      %v780 = vmul.f32 %v746, %v750
      %v781 = vmul.f32 %v747, %v750
      %v782 = vmul.f32 %v748, %v750
      %v783 = vfloor.f32 %v751
      %v784 = vfloor.f32 %v752
      %v785 = vfloor.f32 %v753
      %v786 = vfloor.f32 %v754
      %v787 = vfloor.f32 %v755
      %v788 = vfloor.f32 %v756
      %v789 = vfloor.f32 %v757
      %v790 = vfloor.f32 %v758
      %v791 = vfloor.f32 %v759
      %v792 = vfloor.f32 %v760
      %v793 = vfloor.f32 %v761
      %v794 = vfloor.f32 %v762
      %v795 = vfloor.f32 %v763
      %v796 = vfloor.f32 %v764
      %v797 = vfloor.f32 %v765
      %v798 = vfloor.f32 %v766
      %v799 = vfloor.f32 %v767
      %v800 = vfloor.f32 %v768
      %v801 = vfloor.f32 %v769
      %v802 = vfloor.f32 %v770
      %v803 = vfloor.f32 %v771
      %v804 = vfloor.f32 %v772
      %v805 = vfloor.f32 %v773
      %v806 = vfloor.f32 %v774
      %v807 = vfloor.f32 %v775
      %v808 = vfloor.f32 %v776
      %v809 = vfloor.f32 %v777
      %v810 = vfloor.f32 %v778
      %v811 = vfloor.f32 %v779
      %v812 = vfloor.f32 %v780
      %v813 = vfloor.f32 %v781
      %v814 = vfloor.f32 %v782
      %v815 = vmul.f32 %v783, %v749
      %v816 = vmul.f32 %v784, %v749
      %v817 = vmul.f32 %v785, %v749
      %v818 = vmul.f32 %v786, %v749
      %v819 = vmul.f32 %v787, %v749
      %v820 = vmul.f32 %v788, %v749
      %v821 = vmul.f32 %v789, %v749
      %v822 = vmul.f32 %v790, %v749
      %v823 = vmul.f32 %v791, %v749
      %v824 = vmul.f32 %v792, %v749
      %v825 = vmul.f32 %v793, %v749
      %v826 = vmul.f32 %v794, %v749
      %v827 = vmul.f32 %v795, %v749
      %v828 = vmul.f32 %v796, %v749
      %v829 = vmul.f32 %v797, %v749
      %v830 = vmul.f32 %v798, %v749
      %v831 = vmul.f32 %v799, %v749
      %v832 = vmul.f32 %v800, %v749
      %v833 = vmul.f32 %v801, %v749
      %v834 = vmul.f32 %v802, %v749
      %v835 = vmul.f32 %v803, %v749
      %v836 = vmul.f32 %v804, %v749
      %v837 = vmul.f32 %v805, %v749
      %v838 = vmul.f32 %v806, %v749
      %v839 = vmul.f32 %v807, %v749
      %v840 = vmul.f32 %v808, %v749
      %v841 = vmul.f32 %v809, %v749
      %v842 = vmul.f32 %v810, %v749
      %v843 = vmul.f32 %v811, %v749
      %v844 = vmul.f32 %v812, %v749
      %v845 = vmul.f32 %v813, %v749
      %v846 = vmul.f32 %v814, %v749
      %v847 = vsub.f32 %v685, %v815
      %v848 = vsub.f32 %v686, %v816
      %v849 = vsub.f32 %v687, %v817
      %v850 = vsub.f32 %v688, %v818
      %v851 = vsub.f32 %v689, %v819
      %v852 = vsub.f32 %v690, %v820
      %v853 = vsub.f32 %v691, %v821
      %v854 = vsub.f32 %v692, %v822
      %v855 = vsub.f32 %v693, %v823
      %v856 = vsub.f32 %v694, %v824
      %v857 = vsub.f32 %v695, %v825
      %v858 = vsub.f32 %v696, %v826
      %v859 = vsub.f32 %v697, %v827
      %v860 = vsub.f32 %v698, %v828
      %v861 = vsub.f32 %v699, %v829
      %v862 = vsub.f32 %v700, %v830
      %v863 = vsub.f32 %v701, %v831
      %v864 = vsub.f32 %v702, %v832
      %v865 = vsub.f32 %v703, %v833
      %v866 = vsub.f32 %v704, %v834
      %v867 = vsub.f32 %v705, %v835
      %v868 = vsub.f32 %v706, %v836
      %v869 = vsub.f32 %v707, %v837
      %v870 = vsub.f32 %v708, %v838
      %v871 = vsub.f32 %v709, %v839
      %v872 = vsub.f32 %v710, %v840
      %v873 = vsub.f32 %v711, %v841
      %v874 = vsub.f32 %v712, %v842
      %v875 = vsub.f32 %v713, %v843
      %v876 = vsub.f32 %v714, %v844
      %v877 = vsub.f32 %v715, %v845
      %v878 = vsub.f32 %v716, %v846
      %v879 = vadd.f32 %v847, 0.5
      %v880 = vadd.f32 %v848, 0.5
      %v881 = vadd.f32 %v849, 0.5
      %v882 = vadd.f32 %v850, 0.5
      %v883 = vadd.f32 %v851, 0.5
      %v884 = vadd.f32 %v852, 0.5
      %v885 = vadd.f32 %v853, 0.5
      %v886 = vadd.f32 %v854, 0.5
      %v887 = vadd.f32 %v855, 0.5
      %v888 = vadd.f32 %v856, 0.5
      %v889 = vadd.f32 %v857, 0.5
      %v890 = vadd.f32 %v858, 0.5
      %v891 = vadd.f32 %v859, 0.5
      %v892 = vadd.f32 %v860, 0.5
      %v893 = vadd.f32 %v861, 0.5
      %v894 = vadd.f32 %v862, 0.5
      %v895 = vadd.f32 %v863, 0.5
      %v896 = vadd.f32 %v864, 0.5
      %v897 = vadd.f32 %v865, 0.5
      %v898 = vadd.f32 %v866, 0.5
      %v899 = vadd.f32 %v867, 0.5
      %v900 = vadd.f32 %v868, 0.5
      %v901 = vadd.f32 %v869, 0.5
      %v902 = vadd.f32 %v870, 0.5
      %v903 = vadd.f32 %v871, 0.5
      %v904 = vadd.f32 %v872, 0.5
      %v905 = vadd.f32 %v873, 0.5
      %v906 = vadd.f32 %v874, 0.5
      %v907 = vadd.f32 %v875, 0.5
      %v908 = vadd.f32 %v876, 0.5
      %v909 = vadd.f32 %v877, 0.5
      %v910 = vadd.f32 %v878, 0.5
      %v911 = vstv %s245
      %v912 = vmul.f32 %v879, %v911
      %v913 = vmul.f32 %v880, %v911
      %v914 = vmul.f32 %v881, %v911
      %v915 = vmul.f32 %v882, %v911
      %v916 = vmul.f32 %v883, %v911
      %v917 = vmul.f32 %v884, %v911
      %v918 = vmul.f32 %v885, %v911
      %v919 = vmul.f32 %v886, %v911
      %v920 = vmul.f32 %v887, %v911
      %v921 = vmul.f32 %v888, %v911
      %v922 = vmul.f32 %v889, %v911
      %v923 = vmul.f32 %v890, %v911
      %v924 = vmul.f32 %v891, %v911
      %v925 = vmul.f32 %v892, %v911
      %v926 = vmul.f32 %v893, %v911
      %v927 = vmul.f32 %v894, %v911
      %v928 = vmul.f32 %v895, %v911
      %v929 = vmul.f32 %v896, %v911
      %v930 = vmul.f32 %v897, %v911
      %v931 = vmul.f32 %v898, %v911
      %v932 = vmul.f32 %v899, %v911
      %v933 = vmul.f32 %v900, %v911
      %v934 = vmul.f32 %v901, %v911
      %v935 = vmul.f32 %v902, %v911
      %v936 = vmul.f32 %v903, %v911
      %v937 = vmul.f32 %v904, %v911
      %v938 = vmul.f32 %v905, %v911
      %v939 = vmul.f32 %v906, %v911
      %v940 = vmul.f32 %v907, %v911
      %v941 = vmul.f32 %v908, %v911
      %v942 = vmul.f32 %v909, %v911
      %v943 = vmul.f32 %v910, %v911
      %v944 = vadd.f32 %v783, 0.5
      %v945 = vadd.f32 %v784, 0.5
      %v946 = vadd.f32 %v785, 0.5
      %v947 = vadd.f32 %v786, 0.5
      %v948 = vadd.f32 %v787, 0.5
      %v949 = vadd.f32 %v788, 0.5
      %v950 = vadd.f32 %v789, 0.5
      %v951 = vadd.f32 %v790, 0.5
      %v952 = vadd.f32 %v791, 0.5
      %v953 = vadd.f32 %v792, 0.5
      %v954 = vadd.f32 %v793, 0.5
      %v955 = vadd.f32 %v794, 0.5
      %v956 = vadd.f32 %v795, 0.5
      %v957 = vadd.f32 %v796, 0.5
      %v958 = vadd.f32 %v797, 0.5
      %v959 = vadd.f32 %v798, 0.5
      %v960 = vadd.f32 %v799, 0.5
      %v961 = vadd.f32 %v800, 0.5
      %v962 = vadd.f32 %v801, 0.5
      %v963 = vadd.f32 %v802, 0.5
      %v964 = vadd.f32 %v803, 0.5
      %v965 = vadd.f32 %v804, 0.5
      %v966 = vadd.f32 %v805, 0.5
      %v967 = vadd.f32 %v806, 0.5
      %v968 = vadd.f32 %v807, 0.5
      %v969 = vadd.f32 %v808, 0.5
      %v970 = vadd.f32 %v809, 0.5
      %v971 = vadd.f32 %v810, 0.5
      %v972 = vadd.f32 %v811, 0.5
      %v973 = vadd.f32 %v812, 0.5
      %v974 = vadd.f32 %v813, 0.5
      %v975 = vadd.f32 %v814, 0.5
      %v976 = vmul.f32 %v944, %v911
      %v977 = vmul.f32 %v945, %v911
      %v978 = vmul.f32 %v946, %v911
      %v979 = vmul.f32 %v947, %v911
      %v980 = vmul.f32 %v948, %v911
      %v981 = vmul.f32 %v949, %v911
      %v982 = vmul.f32 %v950, %v911
      %v983 = vmul.f32 %v951, %v911
      %v984 = vmul.f32 %v952, %v911
      %v985 = vmul.f32 %v953, %v911
      %v986 = vmul.f32 %v954, %v911
      %v987 = vmul.f32 %v955, %v911
      %v988 = vmul.f32 %v956, %v911
      %v989 = vmul.f32 %v957, %v911
      %v990 = vmul.f32 %v958, %v911
      %v991 = vmul.f32 %v959, %v911
      %v992 = vmul.f32 %v960, %v911
      %v993 = vmul.f32 %v961, %v911
      %v994 = vmul.f32 %v962, %v911
      %v995 = vmul.f32 %v963, %v911
      %v996 = vmul.f32 %v964, %v911
      %v997 = vmul.f32 %v965, %v911
      %v998 = vmul.f32 %v966, %v911
      %v999 = vmul.f32 %v967, %v911
      %v1000 = vmul.f32 %v968, %v911
      %v1001 = vmul.f32 %v969, %v911
      %v1002 = vmul.f32 %v970, %v911
      %v1003 = vmul.f32 %v971, %v911
      %v1004 = vmul.f32 %v972, %v911
      %v1005 = vmul.f32 %v973, %v911
      %v1006 = vmul.f32 %v974, %v911
      %v1007 = vmul.f32 %v975, %v911
      %v1008 = vmul.f32 %v461, %v911
      %v1009 = vmul.f32 %v466, %v911
      %v1010 = vmul.f32 %v471, %v911
      %v1011 = vmul.f32 %v476, %v911
      %v1012 = vmul.f32 %v481, %v911
      %v1013 = vmul.f32 %v486, %v911
      %v1014 = vmul.f32 %v491, %v911
      %v1015 = vmul.f32 %v496, %v911
      %v1016 = vmul.f32 %v501, %v911
      %v1017 = vmul.f32 %v506, %v911
      %v1018 = vmul.f32 %v511, %v911
      %v1019 = vmul.f32 %v516, %v911
      %v1020 = vmul.f32 %v521, %v911
      %v1021 = vmul.f32 %v526, %v911
      %v1022 = vmul.f32 %v531, %v911
      %v1023 = vmul.f32 %v536, %v911
      %v1024 = vmul.f32 %v541, %v911
      %v1025 = vmul.f32 %v546, %v911
      %v1026 = vmul.f32 %v551, %v911
      %v1027 = vmul.f32 %v556, %v911
      %v1028 = vmul.f32 %v561, %v911
      %v1029 = vmul.f32 %v566, %v911
      %v1030 = vmul.f32 %v571, %v911
      %v1031 = vmul.f32 %v576, %v911
      %v1032 = vmul.f32 %v581, %v911
      %v1033 = vmul.f32 %v586, %v911
      %v1034 = vmul.f32 %v591, %v911
      %v1035 = vmul.f32 %v596, %v911
      %v1036 = vmul.f32 %v601, %v911
      %v1037 = vmul.f32 %v606, %v911
      %v1038 = vmul.f32 %v611, %v911
      %v1039 = vmul.f32 %v616, %v911
      %v1040 = vadd.f32 %v1008, %v912
      %v1041 = vadd.f32 %v1009, %v913
      %v1042 = vadd.f32 %v1010, %v914
      %v1043 = vadd.f32 %v1011, %v915
      %v1044 = vadd.f32 %v1012, %v916
      %v1045 = vadd.f32 %v1013, %v917
      %v1046 = vadd.f32 %v1014, %v918
      %v1047 = vadd.f32 %v1015, %v919
      %v1048 = vadd.f32 %v1016, %v920
      %v1049 = vadd.f32 %v1017, %v921
      %v1050 = vadd.f32 %v1018, %v922
      %v1051 = vadd.f32 %v1019, %v923
      %v1052 = vadd.f32 %v1020, %v924
      %v1053 = vadd.f32 %v1021, %v925
      %v1054 = vadd.f32 %v1022, %v926
      %v1055 = vadd.f32 %v1023, %v927
      %v1056 = vadd.f32 %v1024, %v928
      %v1057 = vadd.f32 %v1025, %v929
      %v1058 = vadd.f32 %v1026, %v930
      %v1059 = vadd.f32 %v1027, %v931
      %v1060 = vadd.f32 %v1028, %v932
      %v1061 = vadd.f32 %v1029, %v933
      %v1062 = vadd.f32 %v1030, %v934
      %v1063 = vadd.f32 %v1031, %v935
      %v1064 = vadd.f32 %v1032, %v936
      %v1065 = vadd.f32 %v1033, %v937
      %v1066 = vadd.f32 %v1034, %v938
      %v1067 = vadd.f32 %v1035, %v939
      %v1068 = vadd.f32 %v1036, %v940
      %v1069 = vadd.f32 %v1037, %v941
      %v1070 = vadd.f32 %v1038, %v942
      %v1071 = vadd.f32 %v1039, %v943
      %v1072 = vadd.f32 %v1008, %v976
      %v1073 = vadd.f32 %v1009, %v977
      %v1074 = vadd.f32 %v1010, %v978
      %v1075 = vadd.f32 %v1011, %v979
      %v1076 = vadd.f32 %v1012, %v980
      %v1077 = vadd.f32 %v1013, %v981
      %v1078 = vadd.f32 %v1014, %v982
      %v1079 = vadd.f32 %v1015, %v983
      %v1080 = vadd.f32 %v1016, %v984
      %v1081 = vadd.f32 %v1017, %v985
      %v1082 = vadd.f32 %v1018, %v986
      %v1083 = vadd.f32 %v1019, %v987
      %v1084 = vadd.f32 %v1020, %v988
      %v1085 = vadd.f32 %v1021, %v989
      %v1086 = vadd.f32 %v1022, %v990
      %v1087 = vadd.f32 %v1023, %v991
      %v1088 = vadd.f32 %v1024, %v992
      %v1089 = vadd.f32 %v1025, %v993
      %v1090 = vadd.f32 %v1026, %v994
      %v1091 = vadd.f32 %v1027, %v995
      %v1092 = vadd.f32 %v1028, %v996
      %v1093 = vadd.f32 %v1029, %v997
      %v1094 = vadd.f32 %v1030, %v998
      %v1095 = vadd.f32 %v1031, %v999
      %v1096 = vadd.f32 %v1032, %v1000
      %v1097 = vadd.f32 %v1033, %v1001
      %v1098 = vadd.f32 %v1034, %v1002
      %v1099 = vadd.f32 %v1035, %v1003
      %v1100 = vadd.f32 %v1036, %v1004
      %v1101 = vadd.f32 %v1037, %v1005
      %v1102 = vadd.f32 %v1038, %v1006
      %v1103 = vadd.f32 %v1039, %v1007
      %v1104 = vmul.f32 %v461, 1.442695
      %v1105 = vpow.pop %v1104
      %v1106 = vmul.f32 %v466, 1.442695
      %v1107 = vpow.pop %v1106
      %v1108 = vmul.f32 %v471, 1.442695
      %v1109 = vpow.pop %v1108
      %v1110 = vmul.f32 %v476, 1.442695
      %v1111 = vpow.pop %v1110
      %v1112 = vmul.f32 %v481, 1.442695
      %v1113 = vpow.pop %v1112
      %v1114 = vmul.f32 %v486, 1.442695
      %v1115 = vpow.pop %v1114
      %v1116 = vmul.f32 %v491, 1.442695
      %v1117 = vpow.pop %v1116
      %v1118 = vmul.f32 %v496, 1.442695
      %v1119 = vpow.pop %v1118
      %v1120 = vmul.f32 %v501, 1.442695
      %v1121 = vpow.pop %v1120
      %v1122 = vmul.f32 %v506, 1.442695
      %v1123 = vpow.pop %v1122
      %v1124 = vmul.f32 %v511, 1.442695
      %v1125 = vpow.pop %v1124
      %v1126 = vmul.f32 %v516, 1.442695
      %v1127 = vpow.pop %v1126
      %v1128 = vmul.f32 %v521, 1.442695
      %v1129 = vpow.pop %v1128
      %v1130 = vmul.f32 %v526, 1.442695
      %v1131 = vpow.pop %v1130
      %v1132 = vmul.f32 %v531, 1.442695
      %v1133 = vpow.pop %v1132
      %v1134 = vmul.f32 %v536, 1.442695
      %v1135 = vpow.pop %v1134
      %v1136 = vmul.f32 %v541, 1.442695
      %v1137 = vpow.pop %v1136
      %v1138 = vmul.f32 %v546, 1.442695
      %v1139 = vpow.pop %v1138
      %v1140 = vmul.f32 %v551, 1.442695
      %v1141 = vpow.pop %v1140
      %v1142 = vmul.f32 %v556, 1.442695
      %v1143 = vpow.pop %v1142
      %v1144 = vmul.f32 %v561, 1.442695
      %v1145 = vpow.pop %v1144
      %v1146 = vmul.f32 %v566, 1.442695
      %v1147 = vpow.pop %v1146
      %v1148 = vmul.f32 %v571, 1.442695
      %v1149 = vpow.pop %v1148
      %v1150 = vmul.f32 %v576, 1.442695
      %v1151 = vpow.pop %v1150
      %v1152 = vmul.f32 %v581, 1.442695
      %v1153 = vpow.pop %v1152
      %v1154 = vmul.f32 %v586, 1.442695
      %v1155 = vpow.pop %v1154
      %v1156 = vmul.f32 %v591, 1.442695
      %v1157 = vpow.pop %v1156
      %v1158 = vmul.f32 %v596, 1.442695
      %v1159 = vpow.pop %v1158
      %v1160 = vmul.f32 %v601, 1.442695
      %v1161 = vpow.pop %v1160
      %v1162 = vmul.f32 %v606, 1.442695
      %v1163 = vpow.pop %v1162
      %v1164 = vmul.f32 %v611, 1.442695
      %v1165 = vpow.pop %v1164
      %v1166 = vmul.f32 %v616, 1.442695
      %v1167 = vpow.pop %v1166
      %v1168 = vmul.f32 %v1105, %v911
      %v1169 = vmul.f32 %v1107, %v911
      %v1170 = vmul.f32 %v1109, %v911
      %v1171 = vmul.f32 %v1111, %v911
      %v1172 = vmul.f32 %v1113, %v911
      %v1173 = vmul.f32 %v1115, %v911
      %v1174 = vmul.f32 %v1117, %v911
      %v1175 = vmul.f32 %v1119, %v911
      %v1176 = vmul.f32 %v1121, %v911
      %v1177 = vmul.f32 %v1123, %v911
      %v1178 = vmul.f32 %v1125, %v911
      %v1179 = vmul.f32 %v1127, %v911
      %v1180 = vmul.f32 %v1129, %v911
      %v1181 = vmul.f32 %v1131, %v911
      %v1182 = vmul.f32 %v1133, %v911
      %v1183 = vmul.f32 %v1135, %v911
      %v1184 = vmul.f32 %v1137, %v911
      %v1185 = vmul.f32 %v1139, %v911
      %v1186 = vmul.f32 %v1141, %v911
      %v1187 = vmul.f32 %v1143, %v911
      %v1188 = vmul.f32 %v1145, %v911
      %v1189 = vmul.f32 %v1147, %v911
      %v1190 = vmul.f32 %v1149, %v911
      %v1191 = vmul.f32 %v1151, %v911
      %v1192 = vmul.f32 %v1153, %v911
      %v1193 = vmul.f32 %v1155, %v911
      %v1194 = vmul.f32 %v1157, %v911
      %v1195 = vmul.f32 %v1159, %v911
      %v1196 = vmul.f32 %v1161, %v911
      %v1197 = vmul.f32 %v1163, %v911
      %v1198 = vmul.f32 %v1165, %v911
      %v1199 = vmul.f32 %v1167, %v911
      %v1200 = vmul.f32 %v1168, 0.5
      %v1201 = vmul.f32 %v1169, 0.5
      %v1202 = vmul.f32 %v1170, 0.5
      %v1203 = vmul.f32 %v1171, 0.5
      %v1204 = vmul.f32 %v1172, 0.5
      %v1205 = vmul.f32 %v1173, 0.5
      %v1206 = vmul.f32 %v1174, 0.5
      %v1207 = vmul.f32 %v1175, 0.5
      %v1208 = vmul.f32 %v1176, 0.5
      %v1209 = vmul.f32 %v1177, 0.5
      %v1210 = vmul.f32 %v1178, 0.5
      %v1211 = vmul.f32 %v1179, 0.5
      %v1212 = vmul.f32 %v1180, 0.5
      %v1213 = vmul.f32 %v1181, 0.5
      %v1214 = vmul.f32 %v1182, 0.5
      %v1215 = vmul.f32 %v1183, 0.5
      %v1216 = vmul.f32 %v1184, 0.5
      %v1217 = vmul.f32 %v1185, 0.5
      %v1218 = vmul.f32 %v1186, 0.5
      %v1219 = vmul.f32 %v1187, 0.5
      %v1220 = vmul.f32 %v1188, 0.5
      %v1221 = vmul.f32 %v1189, 0.5
      %v1222 = vmul.f32 %v1190, 0.5
      %v1223 = vmul.f32 %v1191, 0.5
      %v1224 = vmul.f32 %v1192, 0.5
      %v1225 = vmul.f32 %v1193, 0.5
      %v1226 = vmul.f32 %v1194, 0.5
      %v1227 = vmul.f32 %v1195, 0.5
      %v1228 = vmul.f32 %v1196, 0.5
      %v1229 = vmul.f32 %v1197, 0.5
      %v1230 = vmul.f32 %v1198, 0.5
      %v1231 = vmul.f32 %v1199, 0.5
      %1264 = vrot.lane.b32.xlu0 %v1200, 126
      %v1265 = vpop.permute.xlu0 %1264
      %1266 = vrot.lane.b32.xlu0 %v1201, 126
      %v1267 = vpop.permute.xlu0 %1266
      %1268 = vrot.lane.b32.xlu0 %v1202, 126
      %v1269 = vpop.permute.xlu0 %1268
      %1270 = vrot.lane.b32.xlu0 %v1203, 126
      %v1271 = vpop.permute.xlu0 %1270
      %1272 = vrot.lane.b32.xlu0 %v1204, 126
      %v1273 = vpop.permute.xlu0 %1272
      %1274 = vrot.lane.b32.xlu0 %v1205, 126
      %v1275 = vpop.permute.xlu0 %1274
      %1276 = vrot.lane.b32.xlu0 %v1206, 126
      %v1277 = vpop.permute.xlu0 %1276
      %1278 = vrot.lane.b32.xlu0 %v1207, 126
      %v1279 = vpop.permute.xlu0 %1278
      %1280 = vrot.lane.b32.xlu0 %v1208, 126
      %v1281 = vpop.permute.xlu0 %1280
      %1282 = vrot.lane.b32.xlu0 %v1209, 126
      %v1283 = vpop.permute.xlu0 %1282
      %1284 = vrot.lane.b32.xlu0 %v1210, 126
      %v1285 = vpop.permute.xlu0 %1284
      %1286 = vrot.lane.b32.xlu0 %v1211, 126
      %v1287 = vpop.permute.xlu0 %1286
      %1288 = vrot.lane.b32.xlu0 %v1212, 126
      %v1289 = vpop.permute.xlu0 %1288
      %1290 = vrot.lane.b32.xlu0 %v1213, 126
      %v1291 = vpop.permute.xlu0 %1290
      %1292 = vrot.lane.b32.xlu0 %v1214, 126
      %v1293 = vpop.permute.xlu0 %1292
      %1294 = vrot.lane.b32.xlu0 %v1215, 126
      %v1295 = vpop.permute.xlu0 %1294
      %1296 = vrot.lane.b32.xlu0 %v1216, 126
      %v1297 = vpop.permute.xlu0 %1296
      %1298 = vrot.lane.b32.xlu0 %v1217, 126
      %v1299 = vpop.permute.xlu0 %1298
      %1300 = vrot.lane.b32.xlu0 %v1218, 126
      %v1301 = vpop.permute.xlu0 %1300
      %1302 = vrot.lane.b32.xlu0 %v1219, 126
      %v1303 = vpop.permute.xlu0 %1302
      %1304 = vrot.lane.b32.xlu0 %v1220, 126
      %v1305 = vpop.permute.xlu0 %1304
      %1306 = vrot.lane.b32.xlu0 %v1221, 126
      %v1307 = vpop.permute.xlu0 %1306
      %1308 = vrot.lane.b32.xlu0 %v1222, 126
      %v1309 = vpop.permute.xlu0 %1308
      %1310 = vrot.lane.b32.xlu0 %v1223, 126
      %v1311 = vpop.permute.xlu0 %1310
      %1312 = vrot.lane.b32.xlu0 %v1224, 126
      %v1313 = vpop.permute.xlu0 %1312
      %1314 = vrot.lane.b32.xlu0 %v1225, 126
      %v1315 = vpop.permute.xlu0 %1314
      %1316 = vrot.lane.b32.xlu0 %v1226, 126
      %v1317 = vpop.permute.xlu0 %1316
      %1318 = vrot.lane.b32.xlu0 %v1227, 126
      %v1319 = vpop.permute.xlu0 %1318
      %1320 = vrot.lane.b32.xlu0 %v1228, 126
      %v1321 = vpop.permute.xlu0 %1320
      %1322 = vrot.lane.b32.xlu0 %v1229, 126
      %v1323 = vpop.permute.xlu0 %1322
      %1324 = vrot.lane.b32.xlu0 %v1230, 126
      %v1325 = vpop.permute.xlu0 %1324
      %1326 = vrot.lane.b32.xlu0 %v1231, 126
      %v1327 = vpop.permute.xlu0 %1326
      %v1360 = vsub.f32 %v1040, %v1265
      %v1361 = vsub.f32 %v1041, %v1267
      %v1362 = vsub.f32 %v1042, %v1269
      %v1363 = vsub.f32 %v1043, %v1271
      %v1364 = vsub.f32 %v1044, %v1273
      %v1365 = vsub.f32 %v1045, %v1275
      %v1366 = vsub.f32 %v1046, %v1277
      %v1367 = vsub.f32 %v1047, %v1279
      %v1368 = vsub.f32 %v1048, %v1281
      %v1369 = vsub.f32 %v1049, %v1283
      %v1370 = vsub.f32 %v1050, %v1285
      %v1371 = vsub.f32 %v1051, %v1287
      %v1372 = vsub.f32 %v1052, %v1289
      %v1373 = vsub.f32 %v1053, %v1291
      %v1374 = vsub.f32 %v1054, %v1293
      %v1375 = vsub.f32 %v1055, %v1295
      %v1376 = vsub.f32 %v1056, %v1297
      %v1377 = vsub.f32 %v1057, %v1299
      %v1378 = vsub.f32 %v1058, %v1301
      %v1379 = vsub.f32 %v1059, %v1303
      %v1380 = vsub.f32 %v1060, %v1305
      %v1381 = vsub.f32 %v1061, %v1307
      %v1382 = vsub.f32 %v1062, %v1309
      %v1383 = vsub.f32 %v1063, %v1311
      %v1384 = vsub.f32 %v1064, %v1313
      %v1385 = vsub.f32 %v1065, %v1315
      %v1386 = vsub.f32 %v1066, %v1317
      %v1387 = vsub.f32 %v1067, %v1319
      %v1388 = vsub.f32 %v1068, %v1321
      %v1389 = vsub.f32 %v1069, %v1323
      %v1390 = vsub.f32 %v1070, %v1325
      %v1391 = vsub.f32 %v1071, %v1327
      %v1392 = vsub.f32 %v1072, %v1265
      %v1393 = vsub.f32 %v1073, %v1267
      %v1394 = vsub.f32 %v1074, %v1269
      %v1395 = vsub.f32 %v1075, %v1271
      %v1396 = vsub.f32 %v1076, %v1273
      %v1397 = vsub.f32 %v1077, %v1275
      %v1398 = vsub.f32 %v1078, %v1277
      %v1399 = vsub.f32 %v1079, %v1279
      %v1400 = vsub.f32 %v1080, %v1281
      %v1401 = vsub.f32 %v1081, %v1283
      %v1402 = vsub.f32 %v1082, %v1285
      %v1403 = vsub.f32 %v1083, %v1287
      %v1404 = vsub.f32 %v1084, %v1289
      %v1405 = vsub.f32 %v1085, %v1291
      %v1406 = vsub.f32 %v1086, %v1293
      %v1407 = vsub.f32 %v1087, %v1295
      %v1408 = vsub.f32 %v1088, %v1297
      %v1409 = vsub.f32 %v1089, %v1299
      %v1410 = vsub.f32 %v1090, %v1301
      %v1411 = vsub.f32 %v1091, %v1303
      %v1412 = vsub.f32 %v1092, %v1305
      %v1413 = vsub.f32 %v1093, %v1307
      %v1414 = vsub.f32 %v1094, %v1309
      %v1415 = vsub.f32 %v1095, %v1311
      %v1416 = vsub.f32 %v1096, %v1313
      %v1417 = vsub.f32 %v1097, %v1315
      %v1418 = vsub.f32 %v1098, %v1317
      %v1419 = vsub.f32 %v1099, %v1319
      %v1420 = vsub.f32 %v1100, %v1321
      %v1421 = vsub.f32 %v1101, %v1323
      %v1422 = vsub.f32 %v1102, %v1325
      %v1423 = vsub.f32 %v1103, %v1327
      %v1424 = vadd.f32 %v1040, %v1265
      %v1425 = vadd.f32 %v1041, %v1267
      %v1426 = vadd.f32 %v1042, %v1269
      %v1427 = vadd.f32 %v1043, %v1271
      %v1428 = vadd.f32 %v1044, %v1273
      %v1429 = vadd.f32 %v1045, %v1275
      %v1430 = vadd.f32 %v1046, %v1277
      %v1431 = vadd.f32 %v1047, %v1279
      %v1432 = vadd.f32 %v1048, %v1281
      %v1433 = vadd.f32 %v1049, %v1283
      %v1434 = vadd.f32 %v1050, %v1285
      %v1435 = vadd.f32 %v1051, %v1287
      %v1436 = vadd.f32 %v1052, %v1289
      %v1437 = vadd.f32 %v1053, %v1291
      %v1438 = vadd.f32 %v1054, %v1293
      %v1439 = vadd.f32 %v1055, %v1295
      %v1440 = vadd.f32 %v1056, %v1297
      %v1441 = vadd.f32 %v1057, %v1299
      %v1442 = vadd.f32 %v1058, %v1301
      %v1443 = vadd.f32 %v1059, %v1303
      %v1444 = vadd.f32 %v1060, %v1305
      %v1445 = vadd.f32 %v1061, %v1307
      %v1446 = vadd.f32 %v1062, %v1309
      %v1447 = vadd.f32 %v1063, %v1311
      %v1448 = vadd.f32 %v1064, %v1313
      %v1449 = vadd.f32 %v1065, %v1315
      %v1450 = vadd.f32 %v1066, %v1317
      %v1451 = vadd.f32 %v1067, %v1319
      %v1452 = vadd.f32 %v1068, %v1321
      %v1453 = vadd.f32 %v1069, %v1323
      %v1454 = vadd.f32 %v1070, %v1325
      %v1455 = vadd.f32 %v1071, %v1327
      %v1456 = vadd.f32 %v1072, %v1265
      %v1457 = vadd.f32 %v1073, %v1267
      %v1458 = vadd.f32 %v1074, %v1269
      %v1459 = vadd.f32 %v1075, %v1271
      %v1460 = vadd.f32 %v1076, %v1273
      %v1461 = vadd.f32 %v1077, %v1275
      %v1462 = vadd.f32 %v1078, %v1277
      %v1463 = vadd.f32 %v1079, %v1279
      %v1464 = vadd.f32 %v1080, %v1281
      %v1465 = vadd.f32 %v1081, %v1283
      %v1466 = vadd.f32 %v1082, %v1285
      %v1467 = vadd.f32 %v1083, %v1287
      %v1468 = vadd.f32 %v1084, %v1289
      %v1469 = vadd.f32 %v1085, %v1291
      %v1470 = vadd.f32 %v1086, %v1293
      %v1471 = vadd.f32 %v1087, %v1295
      %v1472 = vadd.f32 %v1088, %v1297
      %v1473 = vadd.f32 %v1089, %v1299
      %v1474 = vadd.f32 %v1090, %v1301
      %v1475 = vadd.f32 %v1091, %v1303
      %v1476 = vadd.f32 %v1092, %v1305
      %v1477 = vadd.f32 %v1093, %v1307
      %v1478 = vadd.f32 %v1094, %v1309
      %v1479 = vadd.f32 %v1095, %v1311
      %v1480 = vadd.f32 %v1096, %v1313
      %v1481 = vadd.f32 %v1097, %v1315
      %v1482 = vadd.f32 %v1098, %v1317
      %v1483 = vadd.f32 %v1099, %v1319
      %v1484 = vadd.f32 %v1100, %v1321
      %v1485 = vadd.f32 %v1101, %v1323
      %v1486 = vadd.f32 %v1102, %v1325
      %v1487 = vadd.f32 %v1103, %v1327
      %1520 = vrot.lane.b32.xlu0 %v1360, 107
      %v1521 = vpop.permute.xlu0 %1520
      %1522 = vrot.lane.b32.xlu0 %v1361, 107
      %v1523 = vpop.permute.xlu0 %1522
      %1524 = vrot.lane.b32.xlu0 %v1362, 107
      %v1525 = vpop.permute.xlu0 %1524
      %1526 = vrot.lane.b32.xlu0 %v1363, 107
      %v1527 = vpop.permute.xlu0 %1526
      %1528 = vrot.lane.b32.xlu0 %v1364, 107
      %v1529 = vpop.permute.xlu0 %1528
      %1530 = vrot.lane.b32.xlu0 %v1365, 107
      %v1531 = vpop.permute.xlu0 %1530
      %1532 = vrot.lane.b32.xlu0 %v1366, 107
      %v1533 = vpop.permute.xlu0 %1532
      %1534 = vrot.lane.b32.xlu0 %v1367, 107
      %v1535 = vpop.permute.xlu0 %1534
      %1536 = vrot.lane.b32.xlu0 %v1368, 107
      %v1537 = vpop.permute.xlu0 %1536
      %1538 = vrot.lane.b32.xlu0 %v1369, 107
      %v1539 = vpop.permute.xlu0 %1538
      %1540 = vrot.lane.b32.xlu0 %v1370, 107
      %v1541 = vpop.permute.xlu0 %1540
      %1542 = vrot.lane.b32.xlu0 %v1371, 107
      %v1543 = vpop.permute.xlu0 %1542
      %1544 = vrot.lane.b32.xlu0 %v1372, 107
      %v1545 = vpop.permute.xlu0 %1544
      %1546 = vrot.lane.b32.xlu0 %v1373, 107
      %v1547 = vpop.permute.xlu0 %1546
      %1548 = vrot.lane.b32.xlu0 %v1374, 107
      %v1549 = vpop.permute.xlu0 %1548
      %1550 = vrot.lane.b32.xlu0 %v1375, 107
      %v1551 = vpop.permute.xlu0 %1550
      %1552 = vrot.lane.b32.xlu0 %v1376, 107
      %v1553 = vpop.permute.xlu0 %1552
      %1554 = vrot.lane.b32.xlu0 %v1377, 107
      %v1555 = vpop.permute.xlu0 %1554
      %1556 = vrot.lane.b32.xlu0 %v1378, 107
      %v1557 = vpop.permute.xlu0 %1556
      %1558 = vrot.lane.b32.xlu0 %v1379, 107
      %v1559 = vpop.permute.xlu0 %1558
      %1560 = vrot.lane.b32.xlu0 %v1380, 107
      %v1561 = vpop.permute.xlu0 %1560
      %1562 = vrot.lane.b32.xlu0 %v1381, 107
      %v1563 = vpop.permute.xlu0 %1562
      %1564 = vrot.lane.b32.xlu0 %v1382, 107
      %v1565 = vpop.permute.xlu0 %1564
      %1566 = vrot.lane.b32.xlu0 %v1383, 107
      %v1567 = vpop.permute.xlu0 %1566
      %1568 = vrot.lane.b32.xlu0 %v1384, 107
      %v1569 = vpop.permute.xlu0 %1568
      %1570 = vrot.lane.b32.xlu0 %v1385, 107
      %v1571 = vpop.permute.xlu0 %1570
      %1572 = vrot.lane.b32.xlu0 %v1386, 107
      %v1573 = vpop.permute.xlu0 %1572
      %1574 = vrot.lane.b32.xlu0 %v1387, 107
      %v1575 = vpop.permute.xlu0 %1574
      %1576 = vrot.lane.b32.xlu0 %v1388, 107
      %v1577 = vpop.permute.xlu0 %1576
      %1578 = vrot.lane.b32.xlu0 %v1389, 107
      %v1579 = vpop.permute.xlu0 %1578
      %1580 = vrot.lane.b32.xlu0 %v1390, 107
      %v1581 = vpop.permute.xlu0 %1580
      %1582 = vrot.lane.b32.xlu0 %v1391, 107
      %v1583 = vpop.permute.xlu0 %1582
      %1648 = vrot.lane.b32.xlu0 %v1392, 107
      %v1649 = vpop.permute.xlu0 %1648
      %1650 = vrot.lane.b32.xlu0 %v1393, 107
      %v1651 = vpop.permute.xlu0 %1650
      %1652 = vrot.lane.b32.xlu0 %v1394, 107
      %v1653 = vpop.permute.xlu0 %1652
      %1654 = vrot.lane.b32.xlu0 %v1395, 107
      %v1655 = vpop.permute.xlu0 %1654
      %1656 = vrot.lane.b32.xlu0 %v1396, 107
      %v1657 = vpop.permute.xlu0 %1656
      %1658 = vrot.lane.b32.xlu0 %v1397, 107
      %v1659 = vpop.permute.xlu0 %1658
      %1660 = vrot.lane.b32.xlu0 %v1398, 107
      %v1661 = vpop.permute.xlu0 %1660
      %1662 = vrot.lane.b32.xlu0 %v1399, 107
      %v1663 = vpop.permute.xlu0 %1662
      %1664 = vrot.lane.b32.xlu0 %v1400, 107
      %v1665 = vpop.permute.xlu0 %1664
      %1666 = vrot.lane.b32.xlu0 %v1401, 107
      %v1667 = vpop.permute.xlu0 %1666
      %1668 = vrot.lane.b32.xlu0 %v1402, 107
      %v1669 = vpop.permute.xlu0 %1668
      %1670 = vrot.lane.b32.xlu0 %v1403, 107
      %v1671 = vpop.permute.xlu0 %1670
      %1672 = vrot.lane.b32.xlu0 %v1404, 107
      %v1673 = vpop.permute.xlu0 %1672
      %1674 = vrot.lane.b32.xlu0 %v1405, 107
      %v1675 = vpop.permute.xlu0 %1674
      %1676 = vrot.lane.b32.xlu0 %v1406, 107
      %v1677 = vpop.permute.xlu0 %1676
      %1678 = vrot.lane.b32.xlu0 %v1407, 107
      %v1679 = vpop.permute.xlu0 %1678
      %1680 = vrot.lane.b32.xlu0 %v1408, 107
      %v1681 = vpop.permute.xlu0 %1680
      %1682 = vrot.lane.b32.xlu0 %v1409, 107
      %v1683 = vpop.permute.xlu0 %1682
      %1684 = vrot.lane.b32.xlu0 %v1410, 107
      %v1685 = vpop.permute.xlu0 %1684
      %1686 = vrot.lane.b32.xlu0 %v1411, 107
      %v1687 = vpop.permute.xlu0 %1686
      %1688 = vrot.lane.b32.xlu0 %v1412, 107
      %v1689 = vpop.permute.xlu0 %1688
      %1690 = vrot.lane.b32.xlu0 %v1413, 107
      %v1691 = vpop.permute.xlu0 %1690
      %1692 = vrot.lane.b32.xlu0 %v1414, 107
      %v1693 = vpop.permute.xlu0 %1692
      %1694 = vrot.lane.b32.xlu0 %v1415, 107
      %v1695 = vpop.permute.xlu0 %1694
      %1696 = vrot.lane.b32.xlu0 %v1416, 107
      %v1697 = vpop.permute.xlu0 %1696
      %1698 = vrot.lane.b32.xlu0 %v1417, 107
      %v1699 = vpop.permute.xlu0 %1698
      %1700 = vrot.lane.b32.xlu0 %v1418, 107
      %v1701 = vpop.permute.xlu0 %1700
      %1702 = vrot.lane.b32.xlu0 %v1419, 107
      %v1703 = vpop.permute.xlu0 %1702
      %1704 = vrot.lane.b32.xlu0 %v1420, 107
      %v1705 = vpop.permute.xlu0 %1704
      %1706 = vrot.lane.b32.xlu0 %v1421, 107
      %v1707 = vpop.permute.xlu0 %1706
      %1708 = vrot.lane.b32.xlu0 %v1422, 107
      %v1709 = vpop.permute.xlu0 %1708
      %1710 = vrot.lane.b32.xlu0 %v1423, 107
      %v1711 = vpop.permute.xlu0 %1710
      %1776 = vrot.lane.b32.xlu0 %v1424, 109
      %v1777 = vpop.permute.xlu0 %1776
      %1778 = vrot.lane.b32.xlu0 %v1425, 109
      %v1779 = vpop.permute.xlu0 %1778
      %1780 = vrot.lane.b32.xlu0 %v1426, 109
      %v1781 = vpop.permute.xlu0 %1780
      %1782 = vrot.lane.b32.xlu0 %v1427, 109
      %v1783 = vpop.permute.xlu0 %1782
      %1784 = vrot.lane.b32.xlu0 %v1428, 109
      %v1785 = vpop.permute.xlu0 %1784
      %1786 = vrot.lane.b32.xlu0 %v1429, 109
      %v1787 = vpop.permute.xlu0 %1786
      %1788 = vrot.lane.b32.xlu0 %v1430, 109
      %v1789 = vpop.permute.xlu0 %1788
      %1790 = vrot.lane.b32.xlu0 %v1431, 109
      %v1791 = vpop.permute.xlu0 %1790
      %1792 = vrot.lane.b32.xlu0 %v1432, 109
      %v1793 = vpop.permute.xlu0 %1792
      %1794 = vrot.lane.b32.xlu0 %v1433, 109
      %v1795 = vpop.permute.xlu0 %1794
      %1796 = vrot.lane.b32.xlu0 %v1434, 109
      %v1797 = vpop.permute.xlu0 %1796
      %1798 = vrot.lane.b32.xlu0 %v1435, 109
      %v1799 = vpop.permute.xlu0 %1798
      %1800 = vrot.lane.b32.xlu0 %v1436, 109
      %v1801 = vpop.permute.xlu0 %1800
      %1802 = vrot.lane.b32.xlu0 %v1437, 109
      %v1803 = vpop.permute.xlu0 %1802
      %1804 = vrot.lane.b32.xlu0 %v1438, 109
      %v1805 = vpop.permute.xlu0 %1804
      %1806 = vrot.lane.b32.xlu0 %v1439, 109
      %v1807 = vpop.permute.xlu0 %1806
      %1808 = vrot.lane.b32.xlu0 %v1440, 109
      %v1809 = vpop.permute.xlu0 %1808
      %1810 = vrot.lane.b32.xlu0 %v1441, 109
      %v1811 = vpop.permute.xlu0 %1810
      %1812 = vrot.lane.b32.xlu0 %v1442, 109
      %v1813 = vpop.permute.xlu0 %1812
      %1814 = vrot.lane.b32.xlu0 %v1443, 109
      %v1815 = vpop.permute.xlu0 %1814
      %1816 = vrot.lane.b32.xlu0 %v1444, 109
      %v1817 = vpop.permute.xlu0 %1816
      %1818 = vrot.lane.b32.xlu0 %v1445, 109
      %v1819 = vpop.permute.xlu0 %1818
      %1820 = vrot.lane.b32.xlu0 %v1446, 109
      %v1821 = vpop.permute.xlu0 %1820
      %1822 = vrot.lane.b32.xlu0 %v1447, 109
      %v1823 = vpop.permute.xlu0 %1822
      %1824 = vrot.lane.b32.xlu0 %v1448, 109
      %v1825 = vpop.permute.xlu0 %1824
      %1826 = vrot.lane.b32.xlu0 %v1449, 109
      %v1827 = vpop.permute.xlu0 %1826
      %1828 = vrot.lane.b32.xlu0 %v1450, 109
      %v1829 = vpop.permute.xlu0 %1828
      %1830 = vrot.lane.b32.xlu0 %v1451, 109
      %v1831 = vpop.permute.xlu0 %1830
      %1832 = vrot.lane.b32.xlu0 %v1452, 109
      %v1833 = vpop.permute.xlu0 %1832
      %1834 = vrot.lane.b32.xlu0 %v1453, 109
      %v1835 = vpop.permute.xlu0 %1834
      %1836 = vrot.lane.b32.xlu0 %v1454, 109
      %v1837 = vpop.permute.xlu0 %1836
      %1838 = vrot.lane.b32.xlu0 %v1455, 109
      %v1839 = vpop.permute.xlu0 %1838
      %1904 = vrot.lane.b32.xlu0 %v1456, 109
      %v1905 = vpop.permute.xlu0 %1904
      %1906 = vrot.lane.b32.xlu0 %v1457, 109
      %v1907 = vpop.permute.xlu0 %1906
      %1908 = vrot.lane.b32.xlu0 %v1458, 109
      %v1909 = vpop.permute.xlu0 %1908
      %1910 = vrot.lane.b32.xlu0 %v1459, 109
      %v1911 = vpop.permute.xlu0 %1910
      %1912 = vrot.lane.b32.xlu0 %v1460, 109
      %v1913 = vpop.permute.xlu0 %1912
      %1914 = vrot.lane.b32.xlu0 %v1461, 109
      %v1915 = vpop.permute.xlu0 %1914
      %1916 = vrot.lane.b32.xlu0 %v1462, 109
      %v1917 = vpop.permute.xlu0 %1916
      %1918 = vrot.lane.b32.xlu0 %v1463, 109
      %v1919 = vpop.permute.xlu0 %1918
      %1920 = vrot.lane.b32.xlu0 %v1464, 109
      %v1921 = vpop.permute.xlu0 %1920
      %1922 = vrot.lane.b32.xlu0 %v1465, 109
      %v1923 = vpop.permute.xlu0 %1922
      %1924 = vrot.lane.b32.xlu0 %v1466, 109
      %v1925 = vpop.permute.xlu0 %1924
      %1926 = vrot.lane.b32.xlu0 %v1467, 109
      %v1927 = vpop.permute.xlu0 %1926
      %1928 = vrot.lane.b32.xlu0 %v1468, 109
      %v1929 = vpop.permute.xlu0 %1928
      %1930 = vrot.lane.b32.xlu0 %v1469, 109
      %v1931 = vpop.permute.xlu0 %1930
      %1932 = vrot.lane.b32.xlu0 %v1470, 109
      %v1933 = vpop.permute.xlu0 %1932
      %1934 = vrot.lane.b32.xlu0 %v1471, 109
      %v1935 = vpop.permute.xlu0 %1934
      %1936 = vrot.lane.b32.xlu0 %v1472, 109
      %v1937 = vpop.permute.xlu0 %1936
      %1938 = vrot.lane.b32.xlu0 %v1473, 109
      %v1939 = vpop.permute.xlu0 %1938
      %1940 = vrot.lane.b32.xlu0 %v1474, 109
      %v1941 = vpop.permute.xlu0 %1940
      %1942 = vrot.lane.b32.xlu0 %v1475, 109
      %v1943 = vpop.permute.xlu0 %1942
      %1944 = vrot.lane.b32.xlu0 %v1476, 109
      %v1945 = vpop.permute.xlu0 %1944
      %1946 = vrot.lane.b32.xlu0 %v1477, 109
      %v1947 = vpop.permute.xlu0 %1946
      %1948 = vrot.lane.b32.xlu0 %v1478, 109
      %v1949 = vpop.permute.xlu0 %1948
      %1950 = vrot.lane.b32.xlu0 %v1479, 109
      %v1951 = vpop.permute.xlu0 %1950
      %1952 = vrot.lane.b32.xlu0 %v1480, 109
      %v1953 = vpop.permute.xlu0 %1952
      %1954 = vrot.lane.b32.xlu0 %v1481, 109
      %v1955 = vpop.permute.xlu0 %1954
      %1956 = vrot.lane.b32.xlu0 %v1482, 109
      %v1957 = vpop.permute.xlu0 %1956
      %1958 = vrot.lane.b32.xlu0 %v1483, 109
      %v1959 = vpop.permute.xlu0 %1958
      %1960 = vrot.lane.b32.xlu0 %v1484, 109
      %v1961 = vpop.permute.xlu0 %1960
      %1962 = vrot.lane.b32.xlu0 %v1485, 109
      %v1963 = vpop.permute.xlu0 %1962
      %1964 = vrot.lane.b32.xlu0 %v1486, 109
      %v1965 = vpop.permute.xlu0 %1964
      %1966 = vrot.lane.b32.xlu0 %v1487, 109
      %v1967 = vpop.permute.xlu0 %1966
      %vm2000 = vcmask 7168
      %v2001 = vsel %vm2000, %v1521, %v1649
      %v2002 = vsel %vm2000, %v1523, %v1651
      %v2003 = vsel %vm2000, %v1525, %v1653
      %v2004 = vsel %vm2000, %v1527, %v1655
      %v2005 = vsel %vm2000, %v1529, %v1657
      %v2006 = vsel %vm2000, %v1531, %v1659
      %v2007 = vsel %vm2000, %v1533, %v1661
      %v2008 = vsel %vm2000, %v1535, %v1663
      %v2009 = vsel %vm2000, %v1537, %v1665
      %v2010 = vsel %vm2000, %v1539, %v1667
      %v2011 = vsel %vm2000, %v1541, %v1669
      %v2012 = vsel %vm2000, %v1543, %v1671
      %v2013 = vsel %vm2000, %v1545, %v1673
      %v2014 = vsel %vm2000, %v1547, %v1675
      %v2015 = vsel %vm2000, %v1549, %v1677
      %v2016 = vsel %vm2000, %v1551, %v1679
      %v2017 = vsel %vm2000, %v1553, %v1681
      %v2018 = vsel %vm2000, %v1555, %v1683
      %v2019 = vsel %vm2000, %v1557, %v1685
      %v2020 = vsel %vm2000, %v1559, %v1687
      %v2021 = vsel %vm2000, %v1561, %v1689
      %v2022 = vsel %vm2000, %v1563, %v1691
      %v2023 = vsel %vm2000, %v1565, %v1693
      %v2024 = vsel %vm2000, %v1567, %v1695
      %v2025 = vsel %vm2000, %v1569, %v1697
      %v2026 = vsel %vm2000, %v1571, %v1699
      %v2027 = vsel %vm2000, %v1573, %v1701
      %v2028 = vsel %vm2000, %v1575, %v1703
      %v2029 = vsel %vm2000, %v1577, %v1705
      %v2030 = vsel %vm2000, %v1579, %v1707
      %v2031 = vsel %vm2000, %v1581, %v1709
      %v2032 = vsel %vm2000, %v1583, %v1711
      %vm2033 = vcmask 15360
      %v2034 = vsel %vm2033, %v2001, %v1777
      %v2035 = vsel %vm2033, %v2002, %v1779
      %v2036 = vsel %vm2033, %v2003, %v1781
      %v2037 = vsel %vm2033, %v2004, %v1783
      %v2038 = vsel %vm2033, %v2005, %v1785
      %v2039 = vsel %vm2033, %v2006, %v1787
      %v2040 = vsel %vm2033, %v2007, %v1789
      %v2041 = vsel %vm2033, %v2008, %v1791
      %v2042 = vsel %vm2033, %v2009, %v1793
      %v2043 = vsel %vm2033, %v2010, %v1795
      %v2044 = vsel %vm2033, %v2011, %v1797
      %v2045 = vsel %vm2033, %v2012, %v1799
      %v2046 = vsel %vm2033, %v2013, %v1801
      %v2047 = vsel %vm2033, %v2014, %v1803
      %v2048 = vsel %vm2033, %v2015, %v1805
      %v2049 = vsel %vm2033, %v2016, %v1807
      %v2050 = vsel %vm2033, %v2017, %v1809
      %v2051 = vsel %vm2033, %v2018, %v1811
      %v2052 = vsel %vm2033, %v2019, %v1813
      %v2053 = vsel %vm2033, %v2020, %v1815
      %v2054 = vsel %vm2033, %v2021, %v1817
      %v2055 = vsel %vm2033, %v2022, %v1819
      %v2056 = vsel %vm2033, %v2023, %v1821
      %v2057 = vsel %vm2033, %v2024, %v1823
      %v2058 = vsel %vm2033, %v2025, %v1825
      %v2059 = vsel %vm2033, %v2026, %v1827
      %v2060 = vsel %vm2033, %v2027, %v1829
      %v2061 = vsel %vm2033, %v2028, %v1831
      %v2062 = vsel %vm2033, %v2029, %v1833
      %v2063 = vsel %vm2033, %v2030, %v1835
      %v2064 = vsel %vm2033, %v2031, %v1837
      %v2065 = vsel %vm2033, %v2032, %v1839
      %vm2066 = vcmask 23552
      %v2067 = vsel %vm2066, %v2034, %v1905
      %v2068 = vsel %vm2066, %v2035, %v1907
      %v2069 = vsel %vm2066, %v2036, %v1909
      %v2070 = vsel %vm2066, %v2037, %v1911
      %v2071 = vsel %vm2066, %v2038, %v1913
      %v2072 = vsel %vm2066, %v2039, %v1915
      %v2073 = vsel %vm2066, %v2040, %v1917
      %v2074 = vsel %vm2066, %v2041, %v1919
      %v2075 = vsel %vm2066, %v2042, %v1921
      %v2076 = vsel %vm2066, %v2043, %v1923
      %v2077 = vsel %vm2066, %v2044, %v1925
      %v2078 = vsel %vm2066, %v2045, %v1927
      %v2079 = vsel %vm2066, %v2046, %v1929
      %v2080 = vsel %vm2066, %v2047, %v1931
      %v2081 = vsel %vm2066, %v2048, %v1933
      %v2082 = vsel %vm2066, %v2049, %v1935
      %v2083 = vsel %vm2066, %v2050, %v1937
      %v2084 = vsel %vm2066, %v2051, %v1939
      %v2085 = vsel %vm2066, %v2052, %v1941
      %v2086 = vsel %vm2066, %v2053, %v1943
      %v2087 = vsel %vm2066, %v2054, %v1945
      %v2088 = vsel %vm2066, %v2055, %v1947
      %v2089 = vsel %vm2066, %v2056, %v1949
      %v2090 = vsel %vm2066, %v2057, %v1951
      %v2091 = vsel %vm2066, %v2058, %v1953
      %v2092 = vsel %vm2066, %v2059, %v1955
      %v2093 = vsel %vm2066, %v2060, %v1957
      %v2094 = vsel %vm2066, %v2061, %v1959
      %v2095 = vsel %vm2066, %v2062, %v1961
      %v2096 = vsel %vm2066, %v2063, %v1963
      %v2097 = vsel %vm2066, %v2064, %v1965
      %v2098 = vsel %vm2066, %v2065, %v1967
      %vm2099 = vcmask 261120
      %2100 = vst.msk [vmem:[%s242] sm:$0xff] %vm2099, %v461
      %2101 = vst.msk [vmem:[%s242 + $0x8] sm:$0xff] %vm2099, %v466
      %2102 = vst.msk [vmem:[%s242 + $0x10] sm:$0xff] %vm2099, %v471
      %2103 = vst.msk [vmem:[%s242 + $0x18] sm:$0xff] %vm2099, %v476
      %2104 = vst.msk [vmem:[%s242 + $0x20] sm:$0xff] %vm2099, %v481
      %2105 = vst.msk [vmem:[%s242 + $0x28] sm:$0xff] %vm2099, %v486
      %2106 = vst.msk [vmem:[%s242 + $0x30] sm:$0xff] %vm2099, %v491
      %2107 = vst.msk [vmem:[%s242 + $0x38] sm:$0xff] %vm2099, %v496
      %2108 = vst.msk [vmem:[%s242 + $0x40] sm:$0xff] %vm2099, %v501
      %2109 = vst.msk [vmem:[%s242 + $0x48] sm:$0xff] %vm2099, %v506
      %2110 = vst.msk [vmem:[%s242 + $0x50] sm:$0xff] %vm2099, %v511
      %2111 = vst.msk [vmem:[%s242 + $0x58] sm:$0xff] %vm2099, %v516
      %2112 = vst.msk [vmem:[%s242 + $0x60] sm:$0xff] %vm2099, %v521
      %2113 = vst.msk [vmem:[%s242 + $0x68] sm:$0xff] %vm2099, %v526
      %2114 = vst.msk [vmem:[%s242 + $0x70] sm:$0xff] %vm2099, %v531
      %2115 = vst.msk [vmem:[%s242 + $0x78] sm:$0xff] %vm2099, %v536
      %2116 = vst.msk [vmem:[%s242 + $0x80] sm:$0xff] %vm2099, %v541
      %2117 = vst.msk [vmem:[%s242 + $0x88] sm:$0xff] %vm2099, %v546
      %2118 = vst.msk [vmem:[%s242 + $0x90] sm:$0xff] %vm2099, %v551
      %2119 = vst.msk [vmem:[%s242 + $0x98] sm:$0xff] %vm2099, %v556
      %2120 = vst.msk [vmem:[%s242 + $0xa0] sm:$0xff] %vm2099, %v561
      %2121 = vst.msk [vmem:[%s242 + $0xa8] sm:$0xff] %vm2099, %v566
      %2122 = vst.msk [vmem:[%s242 + $0xb0] sm:$0xff] %vm2099, %v571
      %2123 = vst.msk [vmem:[%s242 + $0xb8] sm:$0xff] %vm2099, %v576
      %2124 = vst.msk [vmem:[%s242 + $0xc0] sm:$0xff] %vm2099, %v581
      %2125 = vst.msk [vmem:[%s242 + $0xc8] sm:$0xff] %vm2099, %v586
      %2126 = vst.msk [vmem:[%s242 + $0xd0] sm:$0xff] %vm2099, %v591
      %2127 = vst.msk [vmem:[%s242 + $0xd8] sm:$0xff] %vm2099, %v596
      %2128 = vst.msk [vmem:[%s242 + $0xe0] sm:$0xff] %vm2099, %v601
      %2129 = vst.msk [vmem:[%s242 + $0xe8] sm:$0xff] %vm2099, %v606
      %2130 = vst.msk [vmem:[%s242 + $0xf0] sm:$0xff] %vm2099, %v611
      %2131 = vst.msk [vmem:[%s242 + $0xf8] sm:$0xff] %vm2099, %v616
      %2164 = vrot.lane.b32.xlu0 %v2067, 25
      %v2165 = vpop.permute.xlu0 %2164
      %2166 = vrot.lane.b32.xlu0 %v2068, 25
      %v2167 = vpop.permute.xlu0 %2166
      %2168 = vrot.lane.b32.xlu0 %v2069, 25
      %v2169 = vpop.permute.xlu0 %2168
      %2170 = vrot.lane.b32.xlu0 %v2070, 25
      %v2171 = vpop.permute.xlu0 %2170
      %2172 = vrot.lane.b32.xlu0 %v2071, 25
      %v2173 = vpop.permute.xlu0 %2172
      %2174 = vrot.lane.b32.xlu0 %v2072, 25
      %v2175 = vpop.permute.xlu0 %2174
      %2176 = vrot.lane.b32.xlu0 %v2073, 25
      %v2177 = vpop.permute.xlu0 %2176
      %2178 = vrot.lane.b32.xlu0 %v2074, 25
      %v2179 = vpop.permute.xlu0 %2178
      %2180 = vrot.lane.b32.xlu0 %v2075, 25
      %v2181 = vpop.permute.xlu0 %2180
      %2182 = vrot.lane.b32.xlu0 %v2076, 25
      %v2183 = vpop.permute.xlu0 %2182
      %2184 = vrot.lane.b32.xlu0 %v2077, 25
      %v2185 = vpop.permute.xlu0 %2184
      %2186 = vrot.lane.b32.xlu0 %v2078, 25
      %v2187 = vpop.permute.xlu0 %2186
      %2188 = vrot.lane.b32.xlu0 %v2079, 25
      %v2189 = vpop.permute.xlu0 %2188
      %2190 = vrot.lane.b32.xlu0 %v2080, 25
      %v2191 = vpop.permute.xlu0 %2190
      %2192 = vrot.lane.b32.xlu0 %v2081, 25
      %v2193 = vpop.permute.xlu0 %2192
      %2194 = vrot.lane.b32.xlu0 %v2082, 25
      %v2195 = vpop.permute.xlu0 %2194
      %2196 = vrot.lane.b32.xlu0 %v2083, 25
      %v2197 = vpop.permute.xlu0 %2196
      %2198 = vrot.lane.b32.xlu0 %v2084, 25
      %v2199 = vpop.permute.xlu0 %2198
      %2200 = vrot.lane.b32.xlu0 %v2085, 25
      %v2201 = vpop.permute.xlu0 %2200
      %2202 = vrot.lane.b32.xlu0 %v2086, 25
      %v2203 = vpop.permute.xlu0 %2202
      %2204 = vrot.lane.b32.xlu0 %v2087, 25
      %v2205 = vpop.permute.xlu0 %2204
      %2206 = vrot.lane.b32.xlu0 %v2088, 25
      %v2207 = vpop.permute.xlu0 %2206
      %2208 = vrot.lane.b32.xlu0 %v2089, 25
      %v2209 = vpop.permute.xlu0 %2208
      %2210 = vrot.lane.b32.xlu0 %v2090, 25
      %v2211 = vpop.permute.xlu0 %2210
      %2212 = vrot.lane.b32.xlu0 %v2091, 25
      %v2213 = vpop.permute.xlu0 %2212
      %2214 = vrot.lane.b32.xlu0 %v2092, 25
      %v2215 = vpop.permute.xlu0 %2214
      %2216 = vrot.lane.b32.xlu0 %v2093, 25
      %v2217 = vpop.permute.xlu0 %2216
      %2218 = vrot.lane.b32.xlu0 %v2094, 25
      %v2219 = vpop.permute.xlu0 %2218
      %2220 = vrot.lane.b32.xlu0 %v2095, 25
      %v2221 = vpop.permute.xlu0 %2220
      %2222 = vrot.lane.b32.xlu0 %v2096, 25
      %v2223 = vpop.permute.xlu0 %2222
      %2224 = vrot.lane.b32.xlu0 %v2097, 25
      %v2225 = vpop.permute.xlu0 %2224
      %2226 = vrot.lane.b32.xlu0 %v2098, 25
      %v2227 = vpop.permute.xlu0 %2226
      %vm2260 = vcmask 236744
      %2261 = vst.msk [vmem:[%s242] sm:$0xff] %vm2260, %v2165
      %2262 = vst.msk [vmem:[%s242 + $0x8] sm:$0xff] %vm2260, %v2167
      %2263 = vst.msk [vmem:[%s242 + $0x10] sm:$0xff] %vm2260, %v2169
      %2264 = vst.msk [vmem:[%s242 + $0x18] sm:$0xff] %vm2260, %v2171
      %2265 = vst.msk [vmem:[%s242 + $0x20] sm:$0xff] %vm2260, %v2173
      %2266 = vst.msk [vmem:[%s242 + $0x28] sm:$0xff] %vm2260, %v2175
      %2267 = vst.msk [vmem:[%s242 + $0x30] sm:$0xff] %vm2260, %v2177
      %2268 = vst.msk [vmem:[%s242 + $0x38] sm:$0xff] %vm2260, %v2179
      %2269 = vst.msk [vmem:[%s242 + $0x40] sm:$0xff] %vm2260, %v2181
      %2270 = vst.msk [vmem:[%s242 + $0x48] sm:$0xff] %vm2260, %v2183
      %2271 = vst.msk [vmem:[%s242 + $0x50] sm:$0xff] %vm2260, %v2185
      %2272 = vst.msk [vmem:[%s242 + $0x58] sm:$0xff] %vm2260, %v2187
      %2273 = vst.msk [vmem:[%s242 + $0x60] sm:$0xff] %vm2260, %v2189
      %2274 = vst.msk [vmem:[%s242 + $0x68] sm:$0xff] %vm2260, %v2191
      %2275 = vst.msk [vmem:[%s242 + $0x70] sm:$0xff] %vm2260, %v2193
      %2276 = vst.msk [vmem:[%s242 + $0x78] sm:$0xff] %vm2260, %v2195
      %2277 = vst.msk [vmem:[%s242 + $0x80] sm:$0xff] %vm2260, %v2197
      %2278 = vst.msk [vmem:[%s242 + $0x88] sm:$0xff] %vm2260, %v2199
      %2279 = vst.msk [vmem:[%s242 + $0x90] sm:$0xff] %vm2260, %v2201
      %2280 = vst.msk [vmem:[%s242 + $0x98] sm:$0xff] %vm2260, %v2203
      %2281 = vst.msk [vmem:[%s242 + $0xa0] sm:$0xff] %vm2260, %v2205
      %2282 = vst.msk [vmem:[%s242 + $0xa8] sm:$0xff] %vm2260, %v2207
      %2283 = vst.msk [vmem:[%s242 + $0xb0] sm:$0xff] %vm2260, %v2209
      %2284 = vst.msk [vmem:[%s242 + $0xb8] sm:$0xff] %vm2260, %v2211
      %2285 = vst.msk [vmem:[%s242 + $0xc0] sm:$0xff] %vm2260, %v2213
      %2286 = vst.msk [vmem:[%s242 + $0xc8] sm:$0xff] %vm2260, %v2215
      %2287 = vst.msk [vmem:[%s242 + $0xd0] sm:$0xff] %vm2260, %v2217
      %2288 = vst.msk [vmem:[%s242 + $0xd8] sm:$0xff] %vm2260, %v2219
      %2289 = vst.msk [vmem:[%s242 + $0xe0] sm:$0xff] %vm2260, %v2221
      %2290 = vst.msk [vmem:[%s242 + $0xe8] sm:$0xff] %vm2260, %v2223
      %2291 = vst.msk [vmem:[%s242 + $0xf0] sm:$0xff] %vm2260, %v2225
      %2292 = vst.msk [vmem:[%s242 + $0xf8] sm:$0xff] %vm2260, %v2227
      %s2293 = smul.u32 32, %s36
      %p2294 = scmp.lt.s32.totalorder %s2293, 127
      %s2295 = scalar_select %p2294, %s2293, 127
      %s2296 = smul.addr %s2295, 8
      %s2297 = scalar_lea.vmem %s7, %s2296
      // Predicated region
      $region33: #{tpu_custom_call.1} parent=31 // pred_check
        %p2298 = pneg %p136
      $region34: #{tpu_custom_call.1} parent=31 // pred_check_branch
        %2300 = sbr.rel (%p2298) target = $region36
      $region35: #{tpu_custom_call.1} parent=31 // pred_region
        %s2301 = smul.u32 32, %s36
      $region36: #{tpu_custom_call.1} parent=31 // pred_fallthru
        _
    $region32: #{tpu_custom_call.1} parent=5 // pred_fallthru
      _
    %p2302 = scmp.le.s32.totalorder 2, %s31
    // Predicated region
    $region37: #{tpu_custom_call.1} parent=5 // pred_check
      %p2303 = pneg %p2302
    $region38: #{tpu_custom_call.1} parent=5 // pred_check_branch
      %2305 = sbr.rel (%p2303) target = $region40
    $region39: #{tpu_custom_call.1} parent=5 // pred_region
      %s2306 = ssub.s32 %s31, 2
      // Predicated region
      $region41: #{tpu_custom_call.1} parent=39 // pred_check
        %p2307 = pneg %p142
      $region42: #{tpu_custom_call.1} parent=39 // pred_check_branch
        %2309 = sbr.rel (%p2307) target = $region44
      $region43: #{tpu_custom_call.1} parent=39 // pred_region
        %s2310 = smul.u32 32, %s37
        %p2311 = scmp.lt.s32.totalorder %s2310, 127
        %s2312 = scalar_select %p2311, %s2310, 127
        %s2313 = smul.addr %s2312, 8
        %s2314 = scalar_lea.vmem %s7, %s2313
      $region44: #{tpu_custom_call.1} parent=39 // pred_fallthru
        _
    $region40: #{tpu_custom_call.1} parent=5 // pred_fallthru
      _
  $region6: #{tpu_custom_call.1} parent=0 // loop_footer
    %s35 = sadd.s32 1, %s31
  $region7: #{tpu_custom_call.1} parent=0 // loop_footer_branch
    %30 = sbr.rel target = $region3
  $region8: #{tpu_custom_call.1} parent=0 // loop_exit
    _

</llo_original>
